<compile_context>
chip_gen: v7x
topology: tpu7x:2x2x1
jax: 0.10.0
libtpu: 0.0.40
codegen_flags: <defaults>
</compile_context>

<pallas_src>
import jax
import jax.numpy as jnp
from jax.experimental import pallas as pl
from jax.experimental.pallas import tpu as pltpu

LANE = 128


# ----------------------------------------------------------------------------
# Fused kernel: G graphs per grid step, all 3 EdgeGraphConv layers inside.
# ----------------------------------------------------------------------------
def _gcn_edge_fused_kernel(adj_ref, es_ref, x_ref,
                           w1_ref, c1_ref, e1_ref,
                           w2_ref, c2_ref, e2_ref,
                           w3_ref, c3_ref, e3_ref,
                           out_ref):
    a = adj_ref[...]          # (G, N, N)   a[g, v, u] = #edges u->v (no self-loop)
    s = es_ref[...]           # (G, N, N)   s[g, v, u] = sum of scalar edge feats u->v
    x = x_ref[...]            # (G, N, F_in)
    g, n = a.shape[0], a.shape[1]
    f32 = jnp.float32

    # dgl.add_self_loop(g): one self-loop per node (edge feature 0), added ONCE
    # for all layers.  Zero-padded batch entries end up with deg = 1 (no NaNs).
    rows = jax.lax.broadcasted_iota(jnp.int32, (n, n), 0)
    cols = jax.lax.broadcasted_iota(jnp.int32, (n, n), 1)
    a1 = a + (rows == cols).astype(f32)[None]

    deg = jnp.sum(a1, axis=2, keepdims=True)                 # (G, N, 1), always >= 1
    inv_deg = 1.0 / deg
    anorm = a1 * inv_deg                                     # mean-aggregation matrices
    escale = jnp.sum(s, axis=2, keepdims=True) * inv_deg     # (G, N, 1) mean in-edge feat

    def agg(h):               # per-graph mean aggregation: (G, N, F) -> (G, N, F)
        return jnp.einsum('gvu,guf->gvf', anorm, h, preferred_element_type=f32)

    def fc(h, w_ref):         # shared node_fc on the flattened (G*N, F) slab (MXU fill)
        flat = h.reshape(g * n, h.shape[-1])
        return jnp.dot(flat, w_ref[...],
                       preferred_element_type=f32).reshape(g, n, -1)

    # Layer 1 (F_in = 8 << 128): aggregate the narrow features first.
    h = fc(agg(x), w1_ref) + c1_ref[...] + escale * e1_ref[...]
    # Layer 2 (128 -> 128): transform first, then aggregate.
    h = agg(fc(h, w2_ref)) + c2_ref[...] + escale * e2_ref[...]
    # Layer 3 (128 -> 64, lane-padded to 128): transform first, then aggregate.
    h = agg(fc(h, w3_ref)) + c3_ref[...] + escale * e3_ref[...]
    out_ref[...] = h.astype(out_ref.dtype)


# ----------------------------------------------------------------------------
# Wrapper: batched forward (one pallas_call for the whole network).
# ----------------------------------------------------------------------------
def gcn_rl_edge_forward(adj_in, efeat_in, node_feat, params, *,
                        graphs_per_block=None):
    """Batched GCN_RL_Edge forward.

    adj_in:    [B, N, N] f32, adj_in[b, v, u]   = #edges u->v (no self-loops).
    efeat_in:  [B, N, N] f32, efeat_in[b, v, u] = sum of scalar edge features
               on edges u->v (0 where there is no edge).
    node_feat: [B, N, F_in] f32.
    params:    3 tuples (w_node [fi,fo], b_node [fo], w_edge [fo], b_edge [fo]).
    Returns    [B, N, F_out] f32.
    """
    B, N, _ = node_feat.shape
    (w1, bn1, we1, be1), (w2, bn2, we2, be2), (w3, bn3, we3, be3) = params
    h1, h2, f_out = w1.shape[1], w2.shape[1], w3.shape[1]
    f_out_pad = ((f_out + LANE - 1) // LANE) * LANE

    # Fold node-bias + edge-bias into one row vector per layer (both pass
    # straight through the mean); edge weight is a row vector scaled by the
    # per-node mean in-edge feature inside the kernel.
    c1 = (bn1 + be1).reshape(1, h1)
    c2 = (bn2 + be2).reshape(1, h2)
    e1 = we1.reshape(1, h1)
    e2 = we2.reshape(1, h2)
    # Lane-pad the 64-wide last layer to 128 so the output store is lane-dense.
    w3p = jnp.zeros((h2, f_out_pad), jnp.float32).at[:, :f_out].set(w3)
    c3 = jnp.zeros((1, f_out_pad), jnp.float32).at[0, :f_out].set(bn3 + be3)
    e3 = jnp.zeros((1, f_out_pad), jnp.float32).at[0, :f_out].set(we3)

    # Pack several graphs per grid step so the shared 128x128 node_fc matmuls
    # see ~128 rows at once and the per-step overhead is amortized.
    if graphs_per_block is None:
        graphs_per_block = max(1, min(B, -(-128 // N)))     # ceil(128 / N)
    G = graphs_per_block
    B_pad = ((B + G - 1) // G) * G
    if B_pad != B:
        pad = ((0, B_pad - B), (0, 0), (0, 0))
        adj_in = jnp.pad(adj_in, pad)
        efeat_in = jnp.pad(efeat_in, pad)
        node_feat = jnp.pad(node_feat, pad)

    batched = lambda shape: pl.BlockSpec((G,) + tuple(shape[1:]),
                                         lambda b: (b, 0, 0))
    shared = lambda arr: pl.BlockSpec(arr.shape, lambda b: (0, 0))

    out = pl.pallas_call(
        _gcn_edge_fused_kernel,
        out_shape=jax.ShapeDtypeStruct((B_pad, N, f_out_pad), jnp.float32),
        grid=(B_pad // G,),
        in_specs=[
            batched(adj_in.shape),
            batched(efeat_in.shape),
            batched(node_feat.shape),
            shared(w1), shared(c1), shared(e1),
            shared(w2), shared(c2), shared(e2),
            shared(w3p), shared(c3), shared(e3),
        ],
        out_specs=pl.BlockSpec((G, N, f_out_pad), lambda b: (b, 0, 0)),
        compiler_params=pltpu.CompilerParams(
            dimension_semantics=("parallel",)),   # v7x: two TCs split the batch
    )(adj_in, efeat_in, node_feat, w1, c1, e1, w2, c2, e2, w3p, c3, e3)
    return out[:B, :, :f_out]


# ----------------------------------------------------------------------------
# Pure-JAX reference (same math, HIGHEST-precision matmuls) for sanity check.
# ----------------------------------------------------------------------------
def reference_forward(adj_in, efeat_in, node_feat, params):
    _, N, _ = adj_in.shape
    a1 = adj_in + jnp.eye(N, dtype=jnp.float32)
    deg = jnp.sum(a1, axis=2, keepdims=True)
    anorm = a1 / deg
    escale = jnp.sum(efeat_in, axis=2, keepdims=True) / deg
    hp = jax.lax.Precision.HIGHEST
    h = node_feat
    for w, bn, we, be in params:
        hw = jnp.einsum('bnf,fo->bno', h, w, precision=hp)
        h = jnp.einsum('bvu,buo->bvo', anorm, hw, precision=hp) + bn + escale * we + be
    return h


# ----------------------------------------------------------------------------
# Deterministic synthetic parameters matching GCN_RL_Edge shapes:
# 3 EdgeGraphConv layers 8 -> 128 -> 128 -> 64, each with
# node_fc = Linear(fi, fo) and edge_fc = Linear(1, fo).
# ----------------------------------------------------------------------------
def init_params(key):
    in_features, hidden, out_features = 8, 128, 64
    dims = [(in_features, hidden), (hidden, hidden), (hidden, out_features)]
    params = []
    for fi, fo in dims:
        key, kw, kb, kew, keb = jax.random.split(key, 5)
        lim_n = (1.0 / fi) ** 0.5     # torch Linear default init bound
        w_node = jax.random.uniform(kw, (fi, fo), jnp.float32, -lim_n, lim_n)
        b_node = jax.random.uniform(kb, (fo,), jnp.float32, -lim_n, lim_n)
        lim_e = 1.0                   # edge_fc has in_feats = 1
        w_edge = jax.random.uniform(kew, (fo,), jnp.float32, -lim_e, lim_e)
        b_edge = jax.random.uniform(keb, (fo,), jnp.float32, -lim_e, lim_e)
        params.append((w_node, b_node, w_edge, b_edge))
    return params, in_features


if __name__ == "__main__":
    key = jax.random.PRNGKey(0)
    params, in_features = init_params(key)

    # Small synthetic batch of state graphs: B graphs, N nodes each, 0/1 dense
    # adjacency (no self-loops; the kernel adds them once, like the module) and
    # one scalar feature per existing edge.
    B, N = 4, 8
    key, k_adj, k_ef, k_feat = jax.random.split(key, 4)
    adj_uv = (jax.random.uniform(k_adj, (B, N, N)) > 0.6).astype(jnp.float32)
    adj_uv = adj_uv * (1.0 - jnp.eye(N, dtype=jnp.float32))
    efeat_uv = jax.random.normal(k_ef, (B, N, N)) * adj_uv
    node_feat = jax.random.normal(k_feat, (B, N, in_features), jnp.float32)

    # Incoming (dst, src) orientation expected by the kernel.
    adj_in = jnp.swapaxes(adj_uv, 1, 2)
    efeat_in = jnp.swapaxes(efeat_uv, 1, 2)

    fwd = jax.jit(gcn_rl_edge_forward)
    out = jax.block_until_ready(fwd(adj_in, efeat_in, node_feat, params))

    assert out.shape == (B, N, 64), out.shape
    assert out.dtype == jnp.float32

    ref = reference_forward(adj_in, efeat_in, node_feat, params)
    max_err = float(jnp.max(jnp.abs(out - ref)))
    assert max_err < 1e-2, f"mismatch vs reference: {max_err}"

    print("KERNEL_OK")
</pallas_src>

<mosaic_0001>
module attributes {stable_mosaic.version = 11 : i64} {
  func.func @_gcn_edge_fused_kernel(%arg0: i32, %arg1: memref<4x8x8xf32, #tpu.memory_space<vmem>>, %arg2: memref<4x8x8xf32, #tpu.memory_space<vmem>>, %arg3: memref<4x8x8xf32, #tpu.memory_space<vmem>>, %arg4: memref<8x128xf32, #tpu.memory_space<vmem>>, %arg5: memref<1x128xf32, #tpu.memory_space<vmem>>, %arg6: memref<1x128xf32, #tpu.memory_space<vmem>>, %arg7: memref<128x128xf32, #tpu.memory_space<vmem>>, %arg8: memref<1x128xf32, #tpu.memory_space<vmem>>, %arg9: memref<1x128xf32, #tpu.memory_space<vmem>>, %arg10: memref<128x128xf32, #tpu.memory_space<vmem>>, %arg11: memref<1x128xf32, #tpu.memory_space<vmem>>, %arg12: memref<1x128xf32, #tpu.memory_space<vmem>>, %arg13: memref<4x8x128xf32, #tpu.memory_space<vmem>>) attributes {dimension_semantics = [#tpu.dimension_semantics<parallel>], iteration_bounds = array<i64: 1>, scalar_prefetch = 0 : i64, scratch_operands = 0 : i64, tpu.core_type = #tpu.core_type<tc>, window_params = [{transform_indices = @transform_0, window_bounds = array<i64: 4, 8, 8>}, {transform_indices = @transform_1, window_bounds = array<i64: 4, 8, 8>}, {transform_indices = @transform_2, window_bounds = array<i64: 4, 8, 8>}, {pipeline_mode = #tpu.pipeline_mode<synchronous>, transform_indices = @transform_3, window_bounds = array<i64: 8, 128>}, {pipeline_mode = #tpu.pipeline_mode<synchronous>, transform_indices = @transform_4, window_bounds = array<i64: 1, 128>}, {pipeline_mode = #tpu.pipeline_mode<synchronous>, transform_indices = @transform_5, window_bounds = array<i64: 1, 128>}, {pipeline_mode = #tpu.pipeline_mode<synchronous>, transform_indices = @transform_6, window_bounds = array<i64: 128, 128>}, {pipeline_mode = #tpu.pipeline_mode<synchronous>, transform_indices = @transform_7, window_bounds = array<i64: 1, 128>}, {pipeline_mode = #tpu.pipeline_mode<synchronous>, transform_indices = @transform_8, window_bounds = array<i64: 1, 128>}, {pipeline_mode = #tpu.pipeline_mode<synchronous>, transform_indices = @transform_9, window_bounds = array<i64: 128, 128>}, {pipeline_mode = #tpu.pipeline_mode<synchronous>, transform_indices = @transform_10, window_bounds = array<i64: 1, 128>}, {pipeline_mode = #tpu.pipeline_mode<synchronous>, transform_indices = @transform_11, window_bounds = array<i64: 1, 128>}, {transform_indices = @transform_12, window_bounds = array<i64: 4, 8, 128>}]} {
    %c0 = arith.constant 0 : index
    %c0_0 = arith.constant 0 : index
    %c0_1 = arith.constant 0 : index
    %0 = vector.load %arg1[%c0, %c0_0, %c0_1] : memref<4x8x8xf32, #tpu.memory_space<vmem>>, vector<4x8x8xf32>
    %c0_2 = arith.constant 0 : index
    %c0_3 = arith.constant 0 : index
    %c0_4 = arith.constant 0 : index
    %1 = vector.load %arg2[%c0_2, %c0_3, %c0_4] : memref<4x8x8xf32, #tpu.memory_space<vmem>>, vector<4x8x8xf32>
    %c0_5 = arith.constant 0 : index
    %c0_6 = arith.constant 0 : index
    %c0_7 = arith.constant 0 : index
    %2 = vector.load %arg3[%c0_5, %c0_6, %c0_7] : memref<4x8x8xf32, #tpu.memory_space<vmem>>, vector<4x8x8xf32>
    %3 = tpu.iota {dimensions = array<i32: 0>} : vector<8x8xi32>
    %4 = tpu.iota {dimensions = array<i32: 1>} : vector<8x8xi32>
    %5 = arith.cmpi eq, %3, %4 : vector<8x8xi32>
    %6 = arith.extui %5 : vector<8x8xi1> to vector<8x8xi32>
    %7 = arith.sitofp %6 : vector<8x8xi32> to vector<8x8xf32>
    %8 = vector.shape_cast %7 : vector<8x8xf32> to vector<1x8x8xf32>
    %9 = vector.broadcast %8 : vector<1x8x8xf32> to vector<4x8x8xf32>
    %10 = arith.addf %0, %9 : vector<4x8x8xf32>
    %cst = arith.constant dense<0.000000e+00> : vector<4x8xf32>
    %11 = vector.multi_reduction <add>, %10, %cst [2] : vector<4x8x8xf32> to vector<4x8xf32>
    %12 = vector.shape_cast %11 : vector<4x8xf32> to vector<4x8x1xf32>
    %cst_8 = arith.constant 1.000000e+00 : f32
    %13 = vector.broadcast %cst_8 : f32 to vector<4x8x1xf32>
    %14 = arith.divf %13, %12 : vector<4x8x1xf32>
    %15 = vector.broadcast %14 : vector<4x8x1xf32> to vector<4x8x8xf32>
    %16 = arith.mulf %10, %15 : vector<4x8x8xf32>
    %cst_9 = arith.constant dense<0.000000e+00> : vector<4x8xf32>
    %17 = vector.multi_reduction <add>, %1, %cst_9 [2] : vector<4x8x8xf32> to vector<4x8xf32>
    %18 = vector.shape_cast %17 : vector<4x8xf32> to vector<4x8x1xf32>
    %19 = arith.mulf %18, %14 : vector<4x8x1xf32>
    "tpu.trace_start"() <{level = 10 : i32, message = "gvu,guf->gvf"}> : () -> ()
    %cst_10 = arith.constant dense<0.000000e+00> : vector<4x8x8xf32>
    %20 = tpu.matmul %16, %2, %cst_10 {dimension_numbers = #tpu.dot_dimension_numbers<[2], [1], [1], [2], [0, 0, 0, 1, 1, 2], [0], [0]>} : vector<4x8x8xf32>, vector<4x8x8xf32>, vector<4x8x8xf32> -> vector<4x8x8xf32>
    "tpu.trace_stop"() : () -> ()
    %21 = vector.shape_cast %20 : vector<4x8x8xf32> to vector<32x8xf32>
    %c0_11 = arith.constant 0 : index
    %c0_12 = arith.constant 0 : index
    %22 = vector.load %arg4[%c0_11, %c0_12] : memref<8x128xf32, #tpu.memory_space<vmem>>, vector<8x128xf32>
    %cst_13 = arith.constant dense<0.000000e+00> : vector<32x128xf32>
    %23 = tpu.matmul %21, %22, %cst_13 {dimension_numbers = #tpu.dot_dimension_numbers<[1], [0], [0], [1], [0, 0, 1, 1], [], []>} : vector<32x8xf32>, vector<8x128xf32>, vector<32x128xf32> -> vector<32x128xf32>
    %24 = vector.shape_cast %23 : vector<32x128xf32> to vector<4x8x128xf32>
    %c0_14 = arith.constant 0 : index
    %c0_15 = arith.constant 0 : index
    %25 = vector.load %arg5[%c0_14, %c0_15] : memref<1x128xf32, #tpu.memory_space<vmem>>, vector<1x128xf32>
    %26 = vector.shape_cast %25 : vector<1x128xf32> to vector<1x1x128xf32>
    %27 = vector.broadcast %26 : vector<1x1x128xf32> to vector<4x8x128xf32>
    %28 = arith.addf %24, %27 : vector<4x8x128xf32>
    %c0_16 = arith.constant 0 : index
    %c0_17 = arith.constant 0 : index
    %29 = vector.load %arg6[%c0_16, %c0_17] : memref<1x128xf32, #tpu.memory_space<vmem>>, vector<1x128xf32>
    %30 = vector.shape_cast %29 : vector<1x128xf32> to vector<1x1x128xf32>
    %31 = vector.broadcast %19 : vector<4x8x1xf32> to vector<4x8x128xf32>
    %32 = vector.broadcast %30 : vector<1x1x128xf32> to vector<4x8x128xf32>
    %33 = arith.mulf %31, %32 : vector<4x8x128xf32>
    %34 = arith.addf %28, %33 : vector<4x8x128xf32>
    %35 = vector.shape_cast %34 : vector<4x8x128xf32> to vector<32x128xf32>
    %c0_18 = arith.constant 0 : index
    %c0_19 = arith.constant 0 : index
    %36 = vector.load %arg7[%c0_18, %c0_19] : memref<128x128xf32, #tpu.memory_space<vmem>>, vector<128x128xf32>
    %cst_20 = arith.constant dense<0.000000e+00> : vector<32x128xf32>
    %37 = tpu.matmul %35, %36, %cst_20 {dimension_numbers = #tpu.dot_dimension_numbers<[1], [0], [0], [1], [0, 0, 1, 1], [], []>} : vector<32x128xf32>, vector<128x128xf32>, vector<32x128xf32> -> vector<32x128xf32>
    %38 = vector.shape_cast %37 : vector<32x128xf32> to vector<4x8x128xf32>
    "tpu.trace_start"() <{level = 10 : i32, message = "gvu,guf->gvf"}> : () -> ()
    %cst_21 = arith.constant dense<0.000000e+00> : vector<4x8x128xf32>
    %39 = tpu.matmul %16, %38, %cst_21 {dimension_numbers = #tpu.dot_dimension_numbers<[2], [1], [1], [2], [0, 0, 0, 1, 1, 2], [0], [0]>} : vector<4x8x8xf32>, vector<4x8x128xf32>, vector<4x8x128xf32> -> vector<4x8x128xf32>
    "tpu.trace_stop"() : () -> ()
    %c0_22 = arith.constant 0 : index
    %c0_23 = arith.constant 0 : index
    %40 = vector.load %arg8[%c0_22, %c0_23] : memref<1x128xf32, #tpu.memory_space<vmem>>, vector<1x128xf32>
    %41 = vector.shape_cast %40 : vector<1x128xf32> to vector<1x1x128xf32>
    %42 = vector.broadcast %41 : vector<1x1x128xf32> to vector<4x8x128xf32>
    %43 = arith.addf %39, %42 : vector<4x8x128xf32>
    %c0_24 = arith.constant 0 : index
    %c0_25 = arith.constant 0 : index
    %44 = vector.load %arg9[%c0_24, %c0_25] : memref<1x128xf32, #tpu.memory_space<vmem>>, vector<1x128xf32>
    %45 = vector.shape_cast %44 : vector<1x128xf32> to vector<1x1x128xf32>
    %46 = vector.broadcast %19 : vector<4x8x1xf32> to vector<4x8x128xf32>
    %47 = vector.broadcast %45 : vector<1x1x128xf32> to vector<4x8x128xf32>
    %48 = arith.mulf %46, %47 : vector<4x8x128xf32>
    %49 = arith.addf %43, %48 : vector<4x8x128xf32>
    %50 = vector.shape_cast %49 : vector<4x8x128xf32> to vector<32x128xf32>
    %c0_26 = arith.constant 0 : index
    %c0_27 = arith.constant 0 : index
    %51 = vector.load %arg10[%c0_26, %c0_27] : memref<128x128xf32, #tpu.memory_space<vmem>>, vector<128x128xf32>
    %cst_28 = arith.constant dense<0.000000e+00> : vector<32x128xf32>
    %52 = tpu.matmul %50, %51, %cst_28 {dimension_numbers = #tpu.dot_dimension_numbers<[1], [0], [0], [1], [0, 0, 1, 1], [], []>} : vector<32x128xf32>, vector<128x128xf32>, vector<32x128xf32> -> vector<32x128xf32>
    %53 = vector.shape_cast %52 : vector<32x128xf32> to vector<4x8x128xf32>
    "tpu.trace_start"() <{level = 10 : i32, message = "gvu,guf->gvf"}> : () -> ()
    %cst_29 = arith.constant dense<0.000000e+00> : vector<4x8x128xf32>
    %54 = tpu.matmul %16, %53, %cst_29 {dimension_numbers = #tpu.dot_dimension_numbers<[2], [1], [1], [2], [0, 0, 0, 1, 1, 2], [0], [0]>} : vector<4x8x8xf32>, vector<4x8x128xf32>, vector<4x8x128xf32> -> vector<4x8x128xf32>
    "tpu.trace_stop"() : () -> ()
    %c0_30 = arith.constant 0 : index
    %c0_31 = arith.constant 0 : index
    %55 = vector.load %arg11[%c0_30, %c0_31] : memref<1x128xf32, #tpu.memory_space<vmem>>, vector<1x128xf32>
    %56 = vector.shape_cast %55 : vector<1x128xf32> to vector<1x1x128xf32>
    %57 = vector.broadcast %56 : vector<1x1x128xf32> to vector<4x8x128xf32>
    %58 = arith.addf %54, %57 : vector<4x8x128xf32>
    %c0_32 = arith.constant 0 : index
    %c0_33 = arith.constant 0 : index
    %59 = vector.load %arg12[%c0_32, %c0_33] : memref<1x128xf32, #tpu.memory_space<vmem>>, vector<1x128xf32>
    %60 = vector.shape_cast %59 : vector<1x128xf32> to vector<1x1x128xf32>
    %61 = vector.broadcast %19 : vector<4x8x1xf32> to vector<4x8x128xf32>
    %62 = vector.broadcast %60 : vector<1x1x128xf32> to vector<4x8x128xf32>
    %63 = arith.mulf %61, %62 : vector<4x8x128xf32>
    %64 = arith.addf %58, %63 : vector<4x8x128xf32>
    %c0_34 = arith.constant 0 : index
    %c0_35 = arith.constant 0 : index
    %c0_36 = arith.constant 0 : index
    %65 = vector.load %arg13[%c0_34, %c0_35, %c0_36] : memref<4x8x128xf32, #tpu.memory_space<vmem>>, vector<4x8x128xf32>
    tpu.vector_store %arg13[%c0_34, %c0_35, %c0_36], %64 {strides = array<i32>} : memref<4x8x128xf32, #tpu.memory_space<vmem>>, vector<4x8x128xf32>,
    return
  }
  func.func @transform_0(%arg0: i32) -> (i32, i32, i32) {
    %c0_i32 = arith.constant 0 : i32
    %c0_i32_0 = arith.constant 0 : i32
    %c0_i32_1 = arith.constant 0 : i32
    return %arg0, %c0_i32, %c0_i32_0 : i32, i32, i32
  }
  func.func @transform_1(%arg0: i32) -> (i32, i32, i32) {
    %c0_i32 = arith.constant 0 : i32
    %c0_i32_0 = arith.constant 0 : i32
    %c0_i32_1 = arith.constant 0 : i32
    return %arg0, %c0_i32, %c0_i32_0 : i32, i32, i32
  }
  func.func @transform_2(%arg0: i32) -> (i32, i32, i32) {
    %c0_i32 = arith.constant 0 : i32
    %c0_i32_0 = arith.constant 0 : i32
    %c0_i32_1 = arith.constant 0 : i32
    return %arg0, %c0_i32, %c0_i32_0 : i32, i32, i32
  }
  func.func @transform_3(%arg0: i32) -> (i32, i32) {
    %c0_i32 = arith.constant 0 : i32
    %c0_i32_0 = arith.constant 0 : i32
    %c0_i32_1 = arith.constant 0 : i32
    return %c0_i32, %c0_i32_0 : i32, i32
  }
  func.func @transform_4(%arg0: i32) -> (i32, i32) {
    %c0_i32 = arith.constant 0 : i32
    %c0_i32_0 = arith.constant 0 : i32
    %c0_i32_1 = arith.constant 0 : i32
    return %c0_i32, %c0_i32_0 : i32, i32
  }
  func.func @transform_5(%arg0: i32) -> (i32, i32) {
    %c0_i32 = arith.constant 0 : i32
    %c0_i32_0 = arith.constant 0 : i32
    %c0_i32_1 = arith.constant 0 : i32
    return %c0_i32, %c0_i32_0 : i32, i32
  }
  func.func @transform_6(%arg0: i32) -> (i32, i32) {
    %c0_i32 = arith.constant 0 : i32
    %c0_i32_0 = arith.constant 0 : i32
    %c0_i32_1 = arith.constant 0 : i32
    return %c0_i32, %c0_i32_0 : i32, i32
  }
  func.func @transform_7(%arg0: i32) -> (i32, i32) {
    %c0_i32 = arith.constant 0 : i32
    %c0_i32_0 = arith.constant 0 : i32
    %c0_i32_1 = arith.constant 0 : i32
    return %c0_i32, %c0_i32_0 : i32, i32
  }
  func.func @transform_8(%arg0: i32) -> (i32, i32) {
    %c0_i32 = arith.constant 0 : i32
    %c0_i32_0 = arith.constant 0 : i32
    %c0_i32_1 = arith.constant 0 : i32
    return %c0_i32, %c0_i32_0 : i32, i32
  }
  func.func @transform_9(%arg0: i32) -> (i32, i32) {
    %c0_i32 = arith.constant 0 : i32
    %c0_i32_0 = arith.constant 0 : i32
    %c0_i32_1 = arith.constant 0 : i32
    return %c0_i32, %c0_i32_0 : i32, i32
  }
  func.func @transform_10(%arg0: i32) -> (i32, i32) {
    %c0_i32 = arith.constant 0 : i32
    %c0_i32_0 = arith.constant 0 : i32
    %c0_i32_1 = arith.constant 0 : i32
    return %c0_i32, %c0_i32_0 : i32, i32
  }
  func.func @transform_11(%arg0: i32) -> (i32, i32) {
    %c0_i32 = arith.constant 0 : i32
    %c0_i32_0 = arith.constant 0 : i32
    %c0_i32_1 = arith.constant 0 : i32
    return %c0_i32, %c0_i32_0 : i32, i32
  }
  func.func @transform_12(%arg0: i32) -> (i32, i32, i32) {
    %c0_i32 = arith.constant 0 : i32
    %c0_i32_0 = arith.constant 0 : i32
    %c0_i32_1 = arith.constant 0 : i32
    return %arg0, %c0_i32, %c0_i32_0 : i32, i32, i32
  }
}

</mosaic_0001>

<llo_original>
// kernel: gcn_rl_edge_forward.1
$region0: #{gcn_rl_edge_forward.1}
  #allocation0 [shape = 'u32[]', space=smem, size = 0x4, offset = 0x4, fixed_abs, tag = 'smem constant byte address 0x4 - core index']
  #allocation1 [shape = 'u32[144,128]{1,0:T(1,128)}', space=vmem, size = 0x12000, scoped, tag = 'internal scratch']
  %s0 = inlined_call_operand.vmem [shape: f32[4,8,8], index: 0, kind: input, shape index: {}]
  %s1 = inlined_call_operand.vmem [shape: f32[4,8,8], index: 1, kind: input, shape index: {}]
  %s2 = inlined_call_operand.vmem [shape: f32[4,8,8], index: 2, kind: input, shape index: {}]
  %s3 = inlined_call_operand.vmem [shape: f32[8,128], index: 3, kind: input, shape index: {}]
  %s4 = inlined_call_operand.vmem [shape: f32[1,128], index: 4, kind: input, shape index: {}]
  %s5 = inlined_call_operand.vmem [shape: f32[1,128], index: 5, kind: input, shape index: {}]
  %s6 = inlined_call_operand.vmem [shape: f32[128,128], index: 6, kind: input, shape index: {}]
  %s7 = inlined_call_operand.vmem [shape: f32[1,128], index: 7, kind: input, shape index: {}]
  %s8 = inlined_call_operand.vmem [shape: f32[1,128], index: 8, kind: input, shape index: {}]
  %s9 = inlined_call_operand.vmem [shape: f32[128,128], index: 9, kind: input, shape index: {}]
  %s10 = inlined_call_operand.vmem [shape: f32[1,128], index: 10, kind: input, shape index: {}]
  %s11 = inlined_call_operand.vmem [shape: f32[1,128], index: 11, kind: input, shape index: {}]
  %s12 = inlined_call_operand.hbm [shape: f32[4,8,128], index: 12, kind: output, shape index: {}]
  %s13 = sld [smem:[#allocation0]]
  $region58: #{gcn_rl_edge_forward.1} parent=0
    _
  %s15 = ssub.s32 1, %s13
  %s16 = scalar_select 0, %s15, %s13
  $region1: #{gcn_rl_edge_forward.1} parent=0
    #allocation2 [shape = 'u8[16384]{0}', space=vmem, size = 0x4000, scoped, tag = 'output window, operand 0, single buffered']
    #allocation3 [shape = 's32[1]{0}', space=sflag, size = 0x4, scoped, tag = 'scoped memory for gcn_rl_edge_forward.1']
    %17 = vsyncpa [#allocation3], 0
    // Predicated region
    $region2: #{gcn_rl_edge_forward.1} parent=1 // pred_check
      _
    $region3: #{gcn_rl_edge_forward.1} parent=1 // pred_check_branch
      %19 = sbr.rel (0) target = $region5
    $region4: #{gcn_rl_edge_forward.1} parent=1 // pred_region
      _
    $region5: #{gcn_rl_edge_forward.1} parent=1 // pred_fallthru
      _
    // Predicated region
    $region6: #{gcn_rl_edge_forward.1} parent=1 // pred_check
      _
    $region7: #{gcn_rl_edge_forward.1} parent=1 // pred_check_branch
      %21 = sbr.rel (0) target = $region9
    $region8: #{gcn_rl_edge_forward.1} parent=1 // pred_region
      _
    $region9: #{gcn_rl_edge_forward.1} parent=1 // pred_fallthru
      _
    // Predicated region
    $region10: #{gcn_rl_edge_forward.1} parent=1 // pred_check
      _
    $region11: #{gcn_rl_edge_forward.1} parent=1 // pred_check_branch
      %23 = sbr.rel (0) target = $region13
    $region12: #{gcn_rl_edge_forward.1} parent=1 // pred_region
      _
    $region13: #{gcn_rl_edge_forward.1} parent=1 // pred_fallthru
      _
    // Predicated region
    $region14: #{gcn_rl_edge_forward.1} parent=1 // pred_check
      _
    $region15: #{gcn_rl_edge_forward.1} parent=1 // pred_check_branch
      %25 = sbr.rel (0) target = $region17
    $region16: #{gcn_rl_edge_forward.1} parent=1 // pred_region
      _
    $region17: #{gcn_rl_edge_forward.1} parent=1 // pred_fallthru
      _
    // Predicated region
    $region18: #{gcn_rl_edge_forward.1} parent=1 // pred_check
      _
    $region19: #{gcn_rl_edge_forward.1} parent=1 // pred_check_branch
      %27 = sbr.rel (0) target = $region21
    $region20: #{gcn_rl_edge_forward.1} parent=1 // pred_region
      _
    $region21: #{gcn_rl_edge_forward.1} parent=1 // pred_fallthru
      _
    // Predicated region
    $region22: #{gcn_rl_edge_forward.1} parent=1 // pred_check
      _
    $region23: #{gcn_rl_edge_forward.1} parent=1 // pred_check_branch
      %29 = sbr.rel (0) target = $region25
    $region24: #{gcn_rl_edge_forward.1} parent=1 // pred_region
      _
    $region25: #{gcn_rl_edge_forward.1} parent=1 // pred_fallthru
      _
    // Predicated region
    $region26: #{gcn_rl_edge_forward.1} parent=1 // pred_check
      _
    $region27: #{gcn_rl_edge_forward.1} parent=1 // pred_check_branch
      %31 = sbr.rel (0) target = $region29
    $region28: #{gcn_rl_edge_forward.1} parent=1 // pred_region
      _
    $region29: #{gcn_rl_edge_forward.1} parent=1 // pred_fallthru
      _
    // Predicated region
    $region30: #{gcn_rl_edge_forward.1} parent=1 // pred_check
      _
    $region31: #{gcn_rl_edge_forward.1} parent=1 // pred_check_branch
      %33 = sbr.rel (0) target = $region33
    $region32: #{gcn_rl_edge_forward.1} parent=1 // pred_region
      _
    $region33: #{gcn_rl_edge_forward.1} parent=1 // pred_fallthru
      _
    // Predicated region
    $region34: #{gcn_rl_edge_forward.1} parent=1 // pred_check
      _
    $region35: #{gcn_rl_edge_forward.1} parent=1 // pred_check_branch
      %35 = sbr.rel (0) target = $region37
    $region36: #{gcn_rl_edge_forward.1} parent=1 // pred_region
      _
    $region37: #{gcn_rl_edge_forward.1} parent=1 // pred_fallthru
      _
    // Predicated region
    $region38: #{gcn_rl_edge_forward.1} parent=1 // pred_check
      _
    $region39: #{gcn_rl_edge_forward.1} parent=1 // pred_check_branch
      %37 = sbr.rel (0) target = $region41
    $region40: #{gcn_rl_edge_forward.1} parent=1 // pred_region
      _
    $region41: #{gcn_rl_edge_forward.1} parent=1 // pred_fallthru
      _
    // Predicated region
    $region42: #{gcn_rl_edge_forward.1} parent=1 // pred_check
      _
    $region43: #{gcn_rl_edge_forward.1} parent=1 // pred_check_branch
      %39 = sbr.rel (0) target = $region45
    $region44: #{gcn_rl_edge_forward.1} parent=1 // pred_region
      _
    $region45: #{gcn_rl_edge_forward.1} parent=1 // pred_fallthru
      _
    // Predicated region
    $region46: #{gcn_rl_edge_forward.1} parent=1 // pred_check
      _
    $region47: #{gcn_rl_edge_forward.1} parent=1 // pred_check_branch
      %41 = sbr.rel (0) target = $region49
    $region48: #{gcn_rl_edge_forward.1} parent=1 // pred_region
      _
    $region49: #{gcn_rl_edge_forward.1} parent=1 // pred_fallthru
      _
    %v42 = vld [vmem:[%s0] sm:$0xff]
    %v43 = vld [vmem:[%s0 + $0x8] sm:$0xff]
    %v44 = vld [vmem:[%s0 + $0x10] sm:$0xff]
    %v45 = vld [vmem:[%s0 + $0x18] sm:$0xff]
    %v46 = vld [vmem:[%s1] sm:$0xff]
    %v47 = vld [vmem:[%s1 + $0x8] sm:$0xff]
    %v48 = vld [vmem:[%s1 + $0x10] sm:$0xff]
    %v49 = vld [vmem:[%s1 + $0x18] sm:$0xff]
    %v50 = vld [vmem:[%s2] sm:$0xff]
    %v51 = vld [vmem:[%s2 + $0x8] sm:$0xff]
    %v52 = vld [vmem:[%s2 + $0x10] sm:$0xff]
    %v53 = vld [vmem:[%s2 + $0x18] sm:$0xff]
    %v54 = vlaneseq
    %v55 = vshrl.u32 %v54, 7
    %v56 = vlaneseq
    %v57 = vand.u32 %v56, 127
    %vm58 = vcmp.eq.s32.totalorder %v55, %v57
    %v59 = vsel %vm58, 1, 0
    %v60 = vcvt.s32.f32 %v59
    %v61 = vadd.f32 %v42, %v60
    %v62 = vadd.f32 %v43, %v60
    %v63 = vadd.f32 %v44, %v60
    %v64 = vadd.f32 %v45, %v60
    %vm65 = vcmask 64512
    %v66 = vsel %vm65, %v61, 0.0
    %67 = vadd.xlane.f32.xlu0 %v66
    %v68 = vpop.xlane.xlu0 %67
    %v69 = vsel %vm65, %v62, 0.0
    %70 = vadd.xlane.f32.xlu0 %v69
    %v71 = vpop.xlane.xlu0 %70
    %v72 = vsel %vm65, %v63, 0.0
    %73 = vadd.xlane.f32.xlu0 %v72
    %v74 = vpop.xlane.xlu0 %73
    %v75 = vsel %vm65, %v64, 0.0
    %76 = vadd.xlane.f32.xlu0 %v75
    %v77 = vpop.xlane.xlu0 %76
    %v78 = vrcp.pop %v68
    %v79 = vmul.f32 1.0, %v78
    %v80 = vrcp.pop %v71
    %v81 = vmul.f32 1.0, %v80
    %v82 = vrcp.pop %v74
    %v83 = vmul.f32 1.0, %v82
    %v84 = vrcp.pop %v77
    %v85 = vmul.f32 1.0, %v84
    %v86 = vmul.f32 %v61, %v79
    %v87 = vmul.f32 %v62, %v81
    %v88 = vmul.f32 %v63, %v83
    %v89 = vmul.f32 %v64, %v85
    %v90 = vsel %vm65, %v46, 0.0
    %91 = vadd.xlane.f32.xlu0 %v90
    %v92 = vpop.xlane.xlu0 %91
    %v93 = vsel %vm65, %v47, 0.0
    %94 = vadd.xlane.f32.xlu0 %v93
    %v95 = vpop.xlane.xlu0 %94
    %v96 = vsel %vm65, %v48, 0.0
    %97 = vadd.xlane.f32.xlu0 %v96
    %v98 = vpop.xlane.xlu0 %97
    %v99 = vsel %vm65, %v49, 0.0
    %100 = vadd.xlane.f32.xlu0 %v99
    %v101 = vpop.xlane.xlu0 %100
    %v102 = vmul.f32 %v92, %v79
    %v103 = vmul.f32 %v95, %v81
    %v104 = vmul.f32 %v98, %v83
    %v105 = vmul.f32 %v101, %v85
    %v107 = vsel %vm65, %v86, 0
    %109 = vmatprep.subr.mxu0 0.0
    %110 = vmatpush1.msra.mxu0 %v50
    %111 = vmatprep.subr.mxu0 0.0
    %112 = vmatpush1.msra.mxu0 0.0
    %113 = vmatprep.subr.mxu0 0.0
    %114 = vmatpush1.msra.mxu0 0.0
    %115 = vmatprep.subr.mxu0 0.0
    %116 = vmatpush1.msra.mxu0 0.0
    %117 = vmatprep.subr.mxu0 0.0
    %118 = vmatpush1.msra.mxu0 0.0
    %119 = vmatprep.subr.mxu0 0.0
    %120 = vmatpush1.msra.mxu0 0.0
    %121 = vmatprep.subr.mxu0 0.0
    %122 = vmatpush1.msra.mxu0 0.0
    %123 = vmatprep.subr.mxu0 0.0
    %124 = vmatpush1.msra.mxu0 0.0
    %125 = vmatprep.subr.mxu0 0.0
    %126 = vmatpush1.msra.mxu0 0.0
    %127 = vmatprep.subr.mxu0 0.0
    %128 = vmatpush1.msra.mxu0 0.0
    %129 = vmatprep.subr.mxu0 0.0
    %130 = vmatpush1.msra.mxu0 0.0
    %131 = vmatprep.subr.mxu0 0.0
    %132 = vmatpush1.msra.mxu0 0.0
    %133 = vmatprep.subr.mxu0 0.0
    %134 = vmatpush1.msra.mxu0 0.0
    %135 = vmatprep.subr.mxu0 0.0
    %136 = vmatpush1.msra.mxu0 0.0
    %137 = vmatprep.subr.mxu0 0.0
    %138 = vmatpush1.msra.mxu0 0.0
    %139 = vmatprep.subr.mxu0 0.0
    %140 = vmatpush1.msra.mxu0 0.0
    %141 = vmatprep.subr.mxu0 0.0
    %142 = vmatpush1.msra.mxu0 0.0
    %143 = vmatprep.subr.mxu0 0.0
    %144 = vmatpush1.msra.mxu0 0.0
    %145 = vmatprep.subr.mxu0 0.0
    %146 = vmatpush1.msra.mxu0 0.0
    %147 = vmatprep.subr.mxu0 0.0
    %148 = vmatpush1.msra.mxu0 0.0
    %149 = vmatprep.subr.mxu0 0.0
    %150 = vmatpush1.msra.mxu0 0.0
    %151 = vmatprep.subr.mxu0 0.0
    %152 = vmatpush1.msra.mxu0 0.0
    %153 = vmatprep.subr.mxu0 0.0
    %154 = vmatpush1.msra.mxu0 0.0
    %155 = vmatprep.subr.mxu0 0.0
    %156 = vmatpush1.msra.mxu0 0.0
    %157 = vmatprep.subr.mxu0 0.0
    %158 = vmatpush1.msra.mxu0 0.0
    %159 = vmatprep.subr.mxu0 0.0
    %160 = vmatpush1.msra.mxu0 0.0
    %161 = vmatprep.subr.mxu0 0.0
    %162 = vmatpush1.msra.mxu0 0.0
    %163 = vmatprep.subr.mxu0 0.0
    %164 = vmatpush1.msra.mxu0 0.0
    %165 = vmatprep.subr.mxu0 0.0
    %166 = vmatpush1.msra.mxu0 0.0
    %167 = vmatprep.subr.mxu0 0.0
    %168 = vmatpush1.msra.mxu0 0.0
    %169 = vmatprep.subr.mxu0 0.0
    %170 = vmatpush1.msra.mxu0 0.0
    %171 = vmatprep.subr.mxu0 0.0
    %172 = vmatpush1.msra.mxu0 0.0
    %173 = vmatprep.mubr.f32.mxu0 0.0
    %174 = vmatmul.mubr.f32.gmra.mrb[0].mxu0 %v107
    %v175 = vpop.f32.mrb[0].mxu0
    %v176 = vadd.f32 0.0, %v175
    %v177 = vpop.f32.mrb[0].mxu0
    %178 = vdwg.mxu0
    %v180 = vsel %vm65, %v87, 0
    %182 = vmatprep.subr.mxu0 0.0
    %183 = vmatpush1.msra.mxu0 %v51
    %184 = vmatprep.subr.mxu0 0.0
    %185 = vmatpush1.msra.mxu0 0.0
    %186 = vmatprep.subr.mxu0 0.0
    %187 = vmatpush1.msra.mxu0 0.0
    %188 = vmatprep.subr.mxu0 0.0
    %189 = vmatpush1.msra.mxu0 0.0
    %190 = vmatprep.subr.mxu0 0.0
    %191 = vmatpush1.msra.mxu0 0.0
    %192 = vmatprep.subr.mxu0 0.0
    %193 = vmatpush1.msra.mxu0 0.0
    %194 = vmatprep.subr.mxu0 0.0
    %195 = vmatpush1.msra.mxu0 0.0
    %196 = vmatprep.subr.mxu0 0.0
    %197 = vmatpush1.msra.mxu0 0.0
    %198 = vmatprep.subr.mxu0 0.0
    %199 = vmatpush1.msra.mxu0 0.0
    %200 = vmatprep.subr.mxu0 0.0
    %201 = vmatpush1.msra.mxu0 0.0
    %202 = vmatprep.subr.mxu0 0.0
    %203 = vmatpush1.msra.mxu0 0.0
    %204 = vmatprep.subr.mxu0 0.0
    %205 = vmatpush1.msra.mxu0 0.0
    %206 = vmatprep.subr.mxu0 0.0
    %207 = vmatpush1.msra.mxu0 0.0
    %208 = vmatprep.subr.mxu0 0.0
    %209 = vmatpush1.msra.mxu0 0.0
    %210 = vmatprep.subr.mxu0 0.0
    %211 = vmatpush1.msra.mxu0 0.0
    %212 = vmatprep.subr.mxu0 0.0
    %213 = vmatpush1.msra.mxu0 0.0
    %214 = vmatprep.subr.mxu0 0.0
    %215 = vmatpush1.msra.mxu0 0.0
    %216 = vmatprep.subr.mxu0 0.0
    %217 = vmatpush1.msra.mxu0 0.0
    %218 = vmatprep.subr.mxu0 0.0
    %219 = vmatpush1.msra.mxu0 0.0
    %220 = vmatprep.subr.mxu0 0.0
    %221 = vmatpush1.msra.mxu0 0.0
    %222 = vmatprep.subr.mxu0 0.0
    %223 = vmatpush1.msra.mxu0 0.0
    %224 = vmatprep.subr.mxu0 0.0
    %225 = vmatpush1.msra.mxu0 0.0
    %226 = vmatprep.subr.mxu0 0.0
    %227 = vmatpush1.msra.mxu0 0.0
    %228 = vmatprep.subr.mxu0 0.0
    %229 = vmatpush1.msra.mxu0 0.0
    %230 = vmatprep.subr.mxu0 0.0
    %231 = vmatpush1.msra.mxu0 0.0
    %232 = vmatprep.subr.mxu0 0.0
    %233 = vmatpush1.msra.mxu0 0.0
    %234 = vmatprep.subr.mxu0 0.0
    %235 = vmatpush1.msra.mxu0 0.0
    %236 = vmatprep.subr.mxu0 0.0
    %237 = vmatpush1.msra.mxu0 0.0
    %238 = vmatprep.subr.mxu0 0.0
    %239 = vmatpush1.msra.mxu0 0.0
    %240 = vmatprep.subr.mxu0 0.0
    %241 = vmatpush1.msra.mxu0 0.0
    %242 = vmatprep.subr.mxu0 0.0
    %243 = vmatpush1.msra.mxu0 0.0
    %244 = vmatprep.subr.mxu0 0.0
    %245 = vmatpush1.msra.mxu0 0.0
    %246 = vmatprep.mubr.f32.mxu0 0.0
    %247 = vmatmul.mubr.f32.gmra.mrb[0].mxu0 %v180
    %v248 = vpop.f32.mrb[0].mxu0
    %v249 = vadd.f32 0.0, %v248
    %v250 = vpop.f32.mrb[0].mxu0
    %251 = vdwg.mxu0
    %v253 = vsel %vm65, %v88, 0
    %255 = vmatprep.subr.mxu0 0.0
    %256 = vmatpush1.msra.mxu0 %v52
    %257 = vmatprep.subr.mxu0 0.0
    %258 = vmatpush1.msra.mxu0 0.0
    %259 = vmatprep.subr.mxu0 0.0
    %260 = vmatpush1.msra.mxu0 0.0
    %261 = vmatprep.subr.mxu0 0.0
    %262 = vmatpush1.msra.mxu0 0.0
    %263 = vmatprep.subr.mxu0 0.0
    %264 = vmatpush1.msra.mxu0 0.0
    %265 = vmatprep.subr.mxu0 0.0
    %266 = vmatpush1.msra.mxu0 0.0
    %267 = vmatprep.subr.mxu0 0.0
    %268 = vmatpush1.msra.mxu0 0.0
    %269 = vmatprep.subr.mxu0 0.0
    %270 = vmatpush1.msra.mxu0 0.0
    %271 = vmatprep.subr.mxu0 0.0
    %272 = vmatpush1.msra.mxu0 0.0
    %273 = vmatprep.subr.mxu0 0.0
    %274 = vmatpush1.msra.mxu0 0.0
    %275 = vmatprep.subr.mxu0 0.0
    %276 = vmatpush1.msra.mxu0 0.0
    %277 = vmatprep.subr.mxu0 0.0
    %278 = vmatpush1.msra.mxu0 0.0
    %279 = vmatprep.subr.mxu0 0.0
    %280 = vmatpush1.msra.mxu0 0.0
    %281 = vmatprep.subr.mxu0 0.0
    %282 = vmatpush1.msra.mxu0 0.0
    %283 = vmatprep.subr.mxu0 0.0
    %284 = vmatpush1.msra.mxu0 0.0
    %285 = vmatprep.subr.mxu0 0.0
    %286 = vmatpush1.msra.mxu0 0.0
    %287 = vmatprep.subr.mxu0 0.0
    %288 = vmatpush1.msra.mxu0 0.0
    %289 = vmatprep.subr.mxu0 0.0
    %290 = vmatpush1.msra.mxu0 0.0
    %291 = vmatprep.subr.mxu0 0.0
    %292 = vmatpush1.msra.mxu0 0.0
    %293 = vmatprep.subr.mxu0 0.0
    %294 = vmatpush1.msra.mxu0 0.0
    %295 = vmatprep.subr.mxu0 0.0
    %296 = vmatpush1.msra.mxu0 0.0
    %297 = vmatprep.subr.mxu0 0.0
    %298 = vmatpush1.msra.mxu0 0.0
    %299 = vmatprep.subr.mxu0 0.0
    %300 = vmatpush1.msra.mxu0 0.0
    %301 = vmatprep.subr.mxu0 0.0
    %302 = vmatpush1.msra.mxu0 0.0
    %303 = vmatprep.subr.mxu0 0.0
    %304 = vmatpush1.msra.mxu0 0.0
    %305 = vmatprep.subr.mxu0 0.0
    %306 = vmatpush1.msra.mxu0 0.0
    %307 = vmatprep.subr.mxu0 0.0
    %308 = vmatpush1.msra.mxu0 0.0
    %309 = vmatprep.subr.mxu0 0.0
    %310 = vmatpush1.msra.mxu0 0.0
    %311 = vmatprep.subr.mxu0 0.0
    %312 = vmatpush1.msra.mxu0 0.0
    %313 = vmatprep.subr.mxu0 0.0
    %314 = vmatpush1.msra.mxu0 0.0
    %315 = vmatprep.subr.mxu0 0.0
    %316 = vmatpush1.msra.mxu0 0.0
    %317 = vmatprep.subr.mxu0 0.0
    %318 = vmatpush1.msra.mxu0 0.0
    %319 = vmatprep.mubr.f32.mxu0 0.0
    %320 = vmatmul.mubr.f32.gmra.mrb[0].mxu0 %v253
    %v321 = vpop.f32.mrb[0].mxu0
    %v322 = vadd.f32 0.0, %v321
    %v323 = vpop.f32.mrb[0].mxu0
    %324 = vdwg.mxu0
    %v326 = vsel %vm65, %v89, 0
    %328 = vmatprep.subr.mxu0 0.0
    %329 = vmatpush1.msra.mxu0 %v53
    %330 = vmatprep.subr.mxu0 0.0
    %331 = vmatpush1.msra.mxu0 0.0
    %332 = vmatprep.subr.mxu0 0.0
    %333 = vmatpush1.msra.mxu0 0.0
    %334 = vmatprep.subr.mxu0 0.0
    %335 = vmatpush1.msra.mxu0 0.0
    %336 = vmatprep.subr.mxu0 0.0
    %337 = vmatpush1.msra.mxu0 0.0
    %338 = vmatprep.subr.mxu0 0.0
    %339 = vmatpush1.msra.mxu0 0.0
    %340 = vmatprep.subr.mxu0 0.0
    %341 = vmatpush1.msra.mxu0 0.0
    %342 = vmatprep.subr.mxu0 0.0
    %343 = vmatpush1.msra.mxu0 0.0
    %344 = vmatprep.subr.mxu0 0.0
    %345 = vmatpush1.msra.mxu0 0.0
    %346 = vmatprep.subr.mxu0 0.0
    %347 = vmatpush1.msra.mxu0 0.0
    %348 = vmatprep.subr.mxu0 0.0
    %349 = vmatpush1.msra.mxu0 0.0
    %350 = vmatprep.subr.mxu0 0.0
    %351 = vmatpush1.msra.mxu0 0.0
    %352 = vmatprep.subr.mxu0 0.0
    %353 = vmatpush1.msra.mxu0 0.0
    %354 = vmatprep.subr.mxu0 0.0
    %355 = vmatpush1.msra.mxu0 0.0
    %356 = vmatprep.subr.mxu0 0.0
    %357 = vmatpush1.msra.mxu0 0.0
    %358 = vmatprep.subr.mxu0 0.0
    %359 = vmatpush1.msra.mxu0 0.0
    %360 = vmatprep.subr.mxu0 0.0
    %361 = vmatpush1.msra.mxu0 0.0
    %362 = vmatprep.subr.mxu0 0.0
    %363 = vmatpush1.msra.mxu0 0.0
    %364 = vmatprep.subr.mxu0 0.0
    %365 = vmatpush1.msra.mxu0 0.0
    %366 = vmatprep.subr.mxu0 0.0
    %367 = vmatpush1.msra.mxu0 0.0
    %368 = vmatprep.subr.mxu0 0.0
    %369 = vmatpush1.msra.mxu0 0.0
    %370 = vmatprep.subr.mxu0 0.0
    %371 = vmatpush1.msra.mxu0 0.0
    %372 = vmatprep.subr.mxu0 0.0
    %373 = vmatpush1.msra.mxu0 0.0
    %374 = vmatprep.subr.mxu0 0.0
    %375 = vmatpush1.msra.mxu0 0.0
    %376 = vmatprep.subr.mxu0 0.0
    %377 = vmatpush1.msra.mxu0 0.0
    %378 = vmatprep.subr.mxu0 0.0
    %379 = vmatpush1.msra.mxu0 0.0
    %380 = vmatprep.subr.mxu0 0.0
    %381 = vmatpush1.msra.mxu0 0.0
    %382 = vmatprep.subr.mxu0 0.0
    %383 = vmatpush1.msra.mxu0 0.0
    %384 = vmatprep.subr.mxu0 0.0
    %385 = vmatpush1.msra.mxu0 0.0
    %386 = vmatprep.subr.mxu0 0.0
    %387 = vmatpush1.msra.mxu0 0.0
    %388 = vmatprep.subr.mxu0 0.0
    %389 = vmatpush1.msra.mxu0 0.0
    %390 = vmatprep.subr.mxu0 0.0
    %391 = vmatpush1.msra.mxu0 0.0
    %392 = vmatprep.mubr.f32.mxu0 0.0
    %393 = vmatmul.mubr.f32.gmra.mrb[0].mxu0 %v326
    %v394 = vpop.f32.mrb[0].mxu0
    %v395 = vadd.f32 0.0, %v394
    %v396 = vpop.f32.mrb[0].mxu0
    %397 = vdwg.mxu0
    %v398 = vld [vmem:[%s3] sm:$0xff]
    %v400 = vsel %vm65, %v176, 0
    %v403 = vsel %vm65, %v249, 0
    %v406 = vsel %vm65, %v322, 0
    %v409 = vsel %vm65, %v395, 0
    %411 = vmatprep.subr.mxu0 0.0
    %412 = vmatpush1.msra.mxu0 %v398
    %413 = vmatprep.subr.mxu0 0.0
    %414 = vmatpush1.msra.mxu0 0.0
    %415 = vmatprep.subr.mxu0 0.0
    %416 = vmatpush1.msra.mxu0 0.0
    %417 = vmatprep.subr.mxu0 0.0
    %418 = vmatpush1.msra.mxu0 0.0
    %419 = vmatprep.subr.mxu0 0.0
    %420 = vmatpush1.msra.mxu0 0.0
    %421 = vmatprep.subr.mxu0 0.0
    %422 = vmatpush1.msra.mxu0 0.0
    %423 = vmatprep.subr.mxu0 0.0
    %424 = vmatpush1.msra.mxu0 0.0
    %425 = vmatprep.subr.mxu0 0.0
    %426 = vmatpush1.msra.mxu0 0.0
    %427 = vmatprep.subr.mxu0 0.0
    %428 = vmatpush1.msra.mxu0 0.0
    %429 = vmatprep.subr.mxu0 0.0
    %430 = vmatpush1.msra.mxu0 0.0
    %431 = vmatprep.subr.mxu0 0.0
    %432 = vmatpush1.msra.mxu0 0.0
    %433 = vmatprep.subr.mxu0 0.0
    %434 = vmatpush1.msra.mxu0 0.0
    %435 = vmatprep.subr.mxu0 0.0
    %436 = vmatpush1.msra.mxu0 0.0
    %437 = vmatprep.subr.mxu0 0.0
    %438 = vmatpush1.msra.mxu0 0.0
    %439 = vmatprep.subr.mxu0 0.0
    %440 = vmatpush1.msra.mxu0 0.0
    %441 = vmatprep.subr.mxu0 0.0
    %442 = vmatpush1.msra.mxu0 0.0
    %443 = vmatprep.subr.mxu0 0.0
    %444 = vmatpush1.msra.mxu0 0.0
    %445 = vmatprep.subr.mxu0 0.0
    %446 = vmatpush1.msra.mxu0 0.0
    %447 = vmatprep.subr.mxu0 0.0
    %448 = vmatpush1.msra.mxu0 0.0
    %449 = vmatprep.subr.mxu0 0.0
    %450 = vmatpush1.msra.mxu0 0.0
    %451 = vmatprep.subr.mxu0 0.0
    %452 = vmatpush1.msra.mxu0 0.0
    %453 = vmatprep.subr.mxu0 0.0
    %454 = vmatpush1.msra.mxu0 0.0
    %455 = vmatprep.subr.mxu0 0.0
    %456 = vmatpush1.msra.mxu0 0.0
    %457 = vmatprep.subr.mxu0 0.0
    %458 = vmatpush1.msra.mxu0 0.0
    %459 = vmatprep.subr.mxu0 0.0
    %460 = vmatpush1.msra.mxu0 0.0
    %461 = vmatprep.subr.mxu0 0.0
    %462 = vmatpush1.msra.mxu0 0.0
    %463 = vmatprep.subr.mxu0 0.0
    %464 = vmatpush1.msra.mxu0 0.0
    %465 = vmatprep.subr.mxu0 0.0
    %466 = vmatpush1.msra.mxu0 0.0
    %467 = vmatprep.subr.mxu0 0.0
    %468 = vmatpush1.msra.mxu0 0.0
    %469 = vmatprep.subr.mxu0 0.0
    %470 = vmatpush1.msra.mxu0 0.0
    %471 = vmatprep.subr.mxu0 0.0
    %472 = vmatpush1.msra.mxu0 0.0
    %473 = vmatprep.subr.mxu0 0.0
    %474 = vmatpush1.msra.mxu0 0.0
    %475 = vmatprep.mubr.f32.mxu0 0.0
    %476 = vmatmul.mubr.f32.gmra.mrb[0].mxu0 %v400
    %v477 = vpop.f32.mrb[0].mxu0
    %v478 = vadd.f32 0.0, %v477
    %v479 = vpop.f32.mrb[0].mxu0
    %480 = vmatprep.mubr.f32.mxu0 0.0
    %481 = vmatmul.mubr.f32.gmra.mrb[0].mxu0 %v403
    %v482 = vpop.f32.mrb[0].mxu0
    %v483 = vadd.f32 0.0, %v482
    %v484 = vpop.f32.mrb[0].mxu0
    %485 = vmatprep.mubr.f32.mxu0 0.0
    %486 = vmatmul.mubr.f32.gmra.mrb[0].mxu0 %v406
    %v487 = vpop.f32.mrb[0].mxu0
    %v488 = vadd.f32 0.0, %v487
    %v489 = vpop.f32.mrb[0].mxu0
    %490 = vmatprep.mubr.f32.mxu0 0.0
    %491 = vmatmul.mubr.f32.gmra.mrb[0].mxu0 %v409
    %v492 = vpop.f32.mrb[0].mxu0
    %v493 = vadd.f32 0.0, %v492
    %v494 = vpop.f32.mrb[0].mxu0
    %495 = vdwg.mxu0
    %v496 = vld [vmem:[%s4] sm:$0x1]
    %v498 = vlaneseq
    %v499 = vshrl.u32 %v498, 7
    %v500 = vsub.s32 0, %v499
    %v501 = vrot.slane %v496, %v500
    %v503 = vadd.f32 %v478, %v501
    %v504 = vadd.f32 %v483, %v501
    %v505 = vadd.f32 %v488, %v501
    %v506 = vadd.f32 %v493, %v501
    %v507 = vld [vmem:[%s5] sm:$0x1]
    %v509 = vlaneseq
    %v510 = vshrl.u32 %v509, 7
    %v511 = vsub.s32 0, %v510
    %v512 = vrot.slane %v507, %v511
    %v514 = vmul.f32 %v102, %v512
    %v515 = vmul.f32 %v103, %v512
    %v516 = vmul.f32 %v104, %v512
    %v517 = vmul.f32 %v105, %v512
    %v518 = vadd.f32 %v503, %v514
    %v519 = vadd.f32 %v504, %v515
    %v520 = vadd.f32 %v505, %v516
    %v521 = vadd.f32 %v506, %v517
    %v522 = vld [vmem:[%s6] sm:$0xff]
    %v523 = vld [vmem:[%s6 + $0x8] sm:$0xff]
    %v524 = vld [vmem:[%s6 + $0x10] sm:$0xff]
    %v525 = vld [vmem:[%s6 + $0x18] sm:$0xff]
    %v526 = vld [vmem:[%s6 + $0x20] sm:$0xff]
    %v527 = vld [vmem:[%s6 + $0x28] sm:$0xff]
    %v528 = vld [vmem:[%s6 + $0x30] sm:$0xff]
    %v529 = vld [vmem:[%s6 + $0x38] sm:$0xff]
    %v530 = vld [vmem:[%s6 + $0x40] sm:$0xff]
    %v531 = vld [vmem:[%s6 + $0x48] sm:$0xff]
    %v532 = vld [vmem:[%s6 + $0x50] sm:$0xff]
    %v533 = vld [vmem:[%s6 + $0x58] sm:$0xff]
    %v534 = vld [vmem:[%s6 + $0x60] sm:$0xff]
    %v535 = vld [vmem:[%s6 + $0x68] sm:$0xff]
    %v536 = vld [vmem:[%s6 + $0x70] sm:$0xff]
    %v537 = vld [vmem:[%s6 + $0x78] sm:$0xff]
    %538 = vmatprep.subr.mxu0 0.0
    %539 = vmatpush1.msra.mxu0 %v522
    %540 = vmatprep.subr.mxu0 0.0
    %541 = vmatpush1.msra.mxu0 %v523
    %542 = vmatprep.subr.mxu0 0.0
    %543 = vmatpush1.msra.mxu0 %v524
    %544 = vmatprep.subr.mxu0 0.0
    %545 = vmatpush1.msra.mxu0 %v525
    %546 = vmatprep.subr.mxu0 0.0
    %547 = vmatpush1.msra.mxu0 %v526
    %548 = vmatprep.subr.mxu0 0.0
    %549 = vmatpush1.msra.mxu0 %v527
    %550 = vmatprep.subr.mxu0 0.0
    %551 = vmatpush1.msra.mxu0 %v528
    %552 = vmatprep.subr.mxu0 0.0
    %553 = vmatpush1.msra.mxu0 %v529
    %554 = vmatprep.subr.mxu0 0.0
    %555 = vmatpush1.msra.mxu0 %v530
    %556 = vmatprep.subr.mxu0 0.0
    %557 = vmatpush1.msra.mxu0 %v531
    %558 = vmatprep.subr.mxu0 0.0
    %559 = vmatpush1.msra.mxu0 %v532
    %560 = vmatprep.subr.mxu0 0.0
    %561 = vmatpush1.msra.mxu0 %v533
    %562 = vmatprep.subr.mxu0 0.0
    %563 = vmatpush1.msra.mxu0 %v534
    %564 = vmatprep.subr.mxu0 0.0
    %565 = vmatpush1.msra.mxu0 %v535
    %566 = vmatprep.subr.mxu0 0.0
    %567 = vmatpush1.msra.mxu0 %v536
    %568 = vmatprep.subr.mxu0 0.0
    %569 = vmatpush1.msra.mxu0 %v537
    %570 = vmatprep.subr.mxu0 0.0
    %571 = vmatpush1.msra.mxu0 0.0
    %572 = vmatprep.subr.mxu0 0.0
    %573 = vmatpush1.msra.mxu0 0.0
    %574 = vmatprep.subr.mxu0 0.0
    %575 = vmatpush1.msra.mxu0 0.0
    %576 = vmatprep.subr.mxu0 0.0
    %577 = vmatpush1.msra.mxu0 0.0
    %578 = vmatprep.subr.mxu0 0.0
    %579 = vmatpush1.msra.mxu0 0.0
    %580 = vmatprep.subr.mxu0 0.0
    %581 = vmatpush1.msra.mxu0 0.0
    %582 = vmatprep.subr.mxu0 0.0
    %583 = vmatpush1.msra.mxu0 0.0
    %584 = vmatprep.subr.mxu0 0.0
    %585 = vmatpush1.msra.mxu0 0.0
    %586 = vmatprep.subr.mxu0 0.0
    %587 = vmatpush1.msra.mxu0 0.0
    %588 = vmatprep.subr.mxu0 0.0
    %589 = vmatpush1.msra.mxu0 0.0
    %590 = vmatprep.subr.mxu0 0.0
    %591 = vmatpush1.msra.mxu0 0.0
    %592 = vmatprep.subr.mxu0 0.0
    %593 = vmatpush1.msra.mxu0 0.0
    %594 = vmatprep.subr.mxu0 0.0
    %595 = vmatpush1.msra.mxu0 0.0
    %596 = vmatprep.subr.mxu0 0.0
    %597 = vmatpush1.msra.mxu0 0.0
    %598 = vmatprep.subr.mxu0 0.0
    %599 = vmatpush1.msra.mxu0 0.0
    %600 = vmatprep.subr.mxu0 0.0
    %601 = vmatpush1.msra.mxu0 0.0
    %602 = vmatprep.mubr.f32.mxu0 0.0
    %603 = vmatmul.mubr.f32.gmra.mrb[0].mxu0 %v518
    %v604 = vpop.f32.mrb[0].mxu0
    %v605 = vadd.f32 0.0, %v604
    %v606 = vpop.f32.mrb[0].mxu0
    %607 = vmatprep.mubr.f32.mxu0 0.0
    %608 = vmatmul.mubr.f32.gmra.mrb[0].mxu0 %v519
    %v609 = vpop.f32.mrb[0].mxu0
    %v610 = vadd.f32 0.0, %v609
    %v611 = vpop.f32.mrb[0].mxu0
    %612 = vmatprep.mubr.f32.mxu0 0.0
    %613 = vmatmul.mubr.f32.gmra.mrb[0].mxu0 %v520
    %v614 = vpop.f32.mrb[0].mxu0
    %v615 = vadd.f32 0.0, %v614
    %v616 = vpop.f32.mrb[0].mxu0
    %617 = vmatprep.mubr.f32.mxu0 0.0
    %618 = vmatmul.mubr.f32.gmra.mrb[0].mxu0 %v521
    %v619 = vpop.f32.mrb[0].mxu0
    %v620 = vadd.f32 0.0, %v619
    %v621 = vpop.f32.mrb[0].mxu0
    %622 = vdwg.mxu0
    %v623 = vld [vmem:[%s7] sm:$0x1]
    %v625 = vlaneseq
    %v626 = vshrl.u32 %v625, 7
    %v627 = vsub.s32 0, %v626
    %v628 = vrot.slane %v623, %v627
    %630 = vmatprep.subr.mxu0 0.0
    %631 = vmatpush1.msra.mxu0 %v605
    %632 = vmatprep.subr.mxu0 0.0
    %633 = vmatpush1.msra.mxu0 0.0
    %634 = vmatprep.subr.mxu0 0.0
    %635 = vmatpush1.msra.mxu0 0.0
    %636 = vmatprep.subr.mxu0 0.0
    %637 = vmatpush1.msra.mxu0 0.0
    %638 = vmatprep.subr.mxu0 0.0
    %639 = vmatpush1.msra.mxu0 0.0
    %640 = vmatprep.subr.mxu0 0.0
    %641 = vmatpush1.msra.mxu0 0.0
    %642 = vmatprep.subr.mxu0 0.0
    %643 = vmatpush1.msra.mxu0 0.0
    %644 = vmatprep.subr.mxu0 0.0
    %645 = vmatpush1.msra.mxu0 0.0
    %646 = vmatprep.subr.mxu0 0.0
    %647 = vmatpush1.msra.mxu0 0.0
    %648 = vmatprep.subr.mxu0 0.0
    %649 = vmatpush1.msra.mxu0 0.0
    %650 = vmatprep.subr.mxu0 0.0
    %651 = vmatpush1.msra.mxu0 0.0
    %652 = vmatprep.subr.mxu0 0.0
    %653 = vmatpush1.msra.mxu0 0.0
    %654 = vmatprep.subr.mxu0 0.0
    %655 = vmatpush1.msra.mxu0 0.0
    %656 = vmatprep.subr.mxu0 0.0
    %657 = vmatpush1.msra.mxu0 0.0
    %658 = vmatprep.subr.mxu0 0.0
    %659 = vmatpush1.msra.mxu0 0.0
    %660 = vmatprep.subr.mxu0 0.0
    %661 = vmatpush1.msra.mxu0 0.0
    %662 = vmatprep.subr.mxu0 0.0
    %663 = vmatpush1.msra.mxu0 0.0
    %664 = vmatprep.subr.mxu0 0.0
    %665 = vmatpush1.msra.mxu0 0.0
    %666 = vmatprep.subr.mxu0 0.0
    %667 = vmatpush1.msra.mxu0 0.0
    %668 = vmatprep.subr.mxu0 0.0
    %669 = vmatpush1.msra.mxu0 0.0
    %670 = vmatprep.subr.mxu0 0.0
    %671 = vmatpush1.msra.mxu0 0.0
    %672 = vmatprep.subr.mxu0 0.0
    %673 = vmatpush1.msra.mxu0 0.0
    %674 = vmatprep.subr.mxu0 0.0
    %675 = vmatpush1.msra.mxu0 0.0
    %676 = vmatprep.subr.mxu0 0.0
    %677 = vmatpush1.msra.mxu0 0.0
    %678 = vmatprep.subr.mxu0 0.0
    %679 = vmatpush1.msra.mxu0 0.0
    %680 = vmatprep.subr.mxu0 0.0
    %681 = vmatpush1.msra.mxu0 0.0
    %682 = vmatprep.subr.mxu0 0.0
    %683 = vmatpush1.msra.mxu0 0.0
    %684 = vmatprep.subr.mxu0 0.0
    %685 = vmatpush1.msra.mxu0 0.0
    %686 = vmatprep.subr.mxu0 0.0
    %687 = vmatpush1.msra.mxu0 0.0
    %688 = vmatprep.subr.mxu0 0.0
    %689 = vmatpush1.msra.mxu0 0.0
    %690 = vmatprep.subr.mxu0 0.0
    %691 = vmatpush1.msra.mxu0 0.0
    %692 = vmatprep.subr.mxu0 0.0
    %693 = vmatpush1.msra.mxu0 0.0
    %694 = vmatprep.mubr.f32.mxu0 0.0
    %695 = vmatmul.mubr.f32.gmra.mrb[0].mxu0 %v107
    %v696 = vpop.f32.mrb[0].mxu0
    %v697 = vadd.f32 %v628, %v696
    %v698 = vpop.f32.mrb[0].mxu0
    %699 = vdwg.mxu0
    %700 = vmatprep.subr.mxu0 0.0
    %701 = vmatpush1.msra.mxu0 %v610
    %702 = vmatprep.subr.mxu0 0.0
    %703 = vmatpush1.msra.mxu0 0.0
    %704 = vmatprep.subr.mxu0 0.0
    %705 = vmatpush1.msra.mxu0 0.0
    %706 = vmatprep.subr.mxu0 0.0
    %707 = vmatpush1.msra.mxu0 0.0
    %708 = vmatprep.subr.mxu0 0.0
    %709 = vmatpush1.msra.mxu0 0.0
    %710 = vmatprep.subr.mxu0 0.0
    %711 = vmatpush1.msra.mxu0 0.0
    %712 = vmatprep.subr.mxu0 0.0
    %713 = vmatpush1.msra.mxu0 0.0
    %714 = vmatprep.subr.mxu0 0.0
    %715 = vmatpush1.msra.mxu0 0.0
    %716 = vmatprep.subr.mxu0 0.0
    %717 = vmatpush1.msra.mxu0 0.0
    %718 = vmatprep.subr.mxu0 0.0
    %719 = vmatpush1.msra.mxu0 0.0
    %720 = vmatprep.subr.mxu0 0.0
    %721 = vmatpush1.msra.mxu0 0.0
    %722 = vmatprep.subr.mxu0 0.0
    %723 = vmatpush1.msra.mxu0 0.0
    %724 = vmatprep.subr.mxu0 0.0
    %725 = vmatpush1.msra.mxu0 0.0
    %726 = vmatprep.subr.mxu0 0.0
    %727 = vmatpush1.msra.mxu0 0.0
    %728 = vmatprep.subr.mxu0 0.0
    %729 = vmatpush1.msra.mxu0 0.0
    %730 = vmatprep.subr.mxu0 0.0
    %731 = vmatpush1.msra.mxu0 0.0
    %732 = vmatprep.subr.mxu0 0.0
    %733 = vmatpush1.msra.mxu0 0.0
    %734 = vmatprep.subr.mxu0 0.0
    %735 = vmatpush1.msra.mxu0 0.0
    %736 = vmatprep.subr.mxu0 0.0
    %737 = vmatpush1.msra.mxu0 0.0
    %738 = vmatprep.subr.mxu0 0.0
    %739 = vmatpush1.msra.mxu0 0.0
    %740 = vmatprep.subr.mxu0 0.0
    %741 = vmatpush1.msra.mxu0 0.0
    %742 = vmatprep.subr.mxu0 0.0
    %743 = vmatpush1.msra.mxu0 0.0
    %744 = vmatprep.subr.mxu0 0.0
    %745 = vmatpush1.msra.mxu0 0.0
    %746 = vmatprep.subr.mxu0 0.0
    %747 = vmatpush1.msra.mxu0 0.0
    %748 = vmatprep.subr.mxu0 0.0
    %749 = vmatpush1.msra.mxu0 0.0
    %750 = vmatprep.subr.mxu0 0.0
    %751 = vmatpush1.msra.mxu0 0.0
    %752 = vmatprep.subr.mxu0 0.0
    %753 = vmatpush1.msra.mxu0 0.0
    %754 = vmatprep.subr.mxu0 0.0
    %755 = vmatpush1.msra.mxu0 0.0
    %756 = vmatprep.subr.mxu0 0.0
    %757 = vmatpush1.msra.mxu0 0.0
    %758 = vmatprep.subr.mxu0 0.0
    %759 = vmatpush1.msra.mxu0 0.0
    %760 = vmatprep.subr.mxu0 0.0
    %761 = vmatpush1.msra.mxu0 0.0
    %762 = vmatprep.subr.mxu0 0.0
    %763 = vmatpush1.msra.mxu0 0.0
    %764 = vmatprep.mubr.f32.mxu0 0.0
    %765 = vmatmul.mubr.f32.gmra.mrb[0].mxu0 %v180
    %v766 = vpop.f32.mrb[0].mxu0
    %v767 = vadd.f32 %v628, %v766
    %v768 = vpop.f32.mrb[0].mxu0
    %769 = vdwg.mxu0
    %770 = vmatprep.subr.mxu0 0.0
    %771 = vmatpush1.msra.mxu0 %v615
    %772 = vmatprep.subr.mxu0 0.0
    %773 = vmatpush1.msra.mxu0 0.0
    %774 = vmatprep.subr.mxu0 0.0
    %775 = vmatpush1.msra.mxu0 0.0
    %776 = vmatprep.subr.mxu0 0.0
    %777 = vmatpush1.msra.mxu0 0.0
    %778 = vmatprep.subr.mxu0 0.0
    %779 = vmatpush1.msra.mxu0 0.0
    %780 = vmatprep.subr.mxu0 0.0
    %781 = vmatpush1.msra.mxu0 0.0
    %782 = vmatprep.subr.mxu0 0.0
    %783 = vmatpush1.msra.mxu0 0.0
    %784 = vmatprep.subr.mxu0 0.0
    %785 = vmatpush1.msra.mxu0 0.0
    %786 = vmatprep.subr.mxu0 0.0
    %787 = vmatpush1.msra.mxu0 0.0
    %788 = vmatprep.subr.mxu0 0.0
    %789 = vmatpush1.msra.mxu0 0.0
    %790 = vmatprep.subr.mxu0 0.0
    %791 = vmatpush1.msra.mxu0 0.0
    %792 = vmatprep.subr.mxu0 0.0
    %793 = vmatpush1.msra.mxu0 0.0
    %794 = vmatprep.subr.mxu0 0.0
    %795 = vmatpush1.msra.mxu0 0.0
    %796 = vmatprep.subr.mxu0 0.0
    %797 = vmatpush1.msra.mxu0 0.0
    %798 = vmatprep.subr.mxu0 0.0
    %799 = vmatpush1.msra.mxu0 0.0
    %800 = vmatprep.subr.mxu0 0.0
    %801 = vmatpush1.msra.mxu0 0.0
    %802 = vmatprep.subr.mxu0 0.0
    %803 = vmatpush1.msra.mxu0 0.0
    %804 = vmatprep.subr.mxu0 0.0
    %805 = vmatpush1.msra.mxu0 0.0
    %806 = vmatprep.subr.mxu0 0.0
    %807 = vmatpush1.msra.mxu0 0.0
    %808 = vmatprep.subr.mxu0 0.0
    %809 = vmatpush1.msra.mxu0 0.0
    %810 = vmatprep.subr.mxu0 0.0
    %811 = vmatpush1.msra.mxu0 0.0
    %812 = vmatprep.subr.mxu0 0.0
    %813 = vmatpush1.msra.mxu0 0.0
    %814 = vmatprep.subr.mxu0 0.0
    %815 = vmatpush1.msra.mxu0 0.0
    %816 = vmatprep.subr.mxu0 0.0
    %817 = vmatpush1.msra.mxu0 0.0
    %818 = vmatprep.subr.mxu0 0.0
    %819 = vmatpush1.msra.mxu0 0.0
    %820 = vmatprep.subr.mxu0 0.0
    %821 = vmatpush1.msra.mxu0 0.0
    %822 = vmatprep.subr.mxu0 0.0
    %823 = vmatpush1.msra.mxu0 0.0
    %824 = vmatprep.subr.mxu0 0.0
    %825 = vmatpush1.msra.mxu0 0.0
    %826 = vmatprep.subr.mxu0 0.0
    %827 = vmatpush1.msra.mxu0 0.0
    %828 = vmatprep.subr.mxu0 0.0
    %829 = vmatpush1.msra.mxu0 0.0
    %830 = vmatprep.subr.mxu0 0.0
    %831 = vmatpush1.msra.mxu0 0.0
    %832 = vmatprep.subr.mxu0 0.0
    %833 = vmatpush1.msra.mxu0 0.0
    %834 = vmatprep.mubr.f32.mxu0 0.0
    %835 = vmatmul.mubr.f32.gmra.mrb[0].mxu0 %v253
    %v836 = vpop.f32.mrb[0].mxu0
    %v837 = vadd.f32 %v628, %v836
    %v838 = vpop.f32.mrb[0].mxu0
    %839 = vdwg.mxu0
    %840 = vmatprep.subr.mxu0 0.0
    %841 = vmatpush1.msra.mxu0 %v620
    %842 = vmatprep.subr.mxu0 0.0
    %843 = vmatpush1.msra.mxu0 0.0
    %844 = vmatprep.subr.mxu0 0.0
    %845 = vmatpush1.msra.mxu0 0.0
    %846 = vmatprep.subr.mxu0 0.0
    %847 = vmatpush1.msra.mxu0 0.0
    %848 = vmatprep.subr.mxu0 0.0
    %849 = vmatpush1.msra.mxu0 0.0
    %850 = vmatprep.subr.mxu0 0.0
    %851 = vmatpush1.msra.mxu0 0.0
    %852 = vmatprep.subr.mxu0 0.0
    %853 = vmatpush1.msra.mxu0 0.0
    %854 = vmatprep.subr.mxu0 0.0
    %855 = vmatpush1.msra.mxu0 0.0
    %856 = vmatprep.subr.mxu0 0.0
    %857 = vmatpush1.msra.mxu0 0.0
    %858 = vmatprep.subr.mxu0 0.0
    %859 = vmatpush1.msra.mxu0 0.0
    %860 = vmatprep.subr.mxu0 0.0
    %861 = vmatpush1.msra.mxu0 0.0
    %862 = vmatprep.subr.mxu0 0.0
    %863 = vmatpush1.msra.mxu0 0.0
    %864 = vmatprep.subr.mxu0 0.0
    %865 = vmatpush1.msra.mxu0 0.0
    %866 = vmatprep.subr.mxu0 0.0
    %867 = vmatpush1.msra.mxu0 0.0
    %868 = vmatprep.subr.mxu0 0.0
    %869 = vmatpush1.msra.mxu0 0.0
    %870 = vmatprep.subr.mxu0 0.0
    %871 = vmatpush1.msra.mxu0 0.0
    %872 = vmatprep.subr.mxu0 0.0
    %873 = vmatpush1.msra.mxu0 0.0
    %874 = vmatprep.subr.mxu0 0.0
    %875 = vmatpush1.msra.mxu0 0.0
    %876 = vmatprep.subr.mxu0 0.0
    %877 = vmatpush1.msra.mxu0 0.0
    %878 = vmatprep.subr.mxu0 0.0
    %879 = vmatpush1.msra.mxu0 0.0
    %880 = vmatprep.subr.mxu0 0.0
    %881 = vmatpush1.msra.mxu0 0.0
    %882 = vmatprep.subr.mxu0 0.0
    %883 = vmatpush1.msra.mxu0 0.0
    %884 = vmatprep.subr.mxu0 0.0
    %885 = vmatpush1.msra.mxu0 0.0
    %886 = vmatprep.subr.mxu0 0.0
    %887 = vmatpush1.msra.mxu0 0.0
    %888 = vmatprep.subr.mxu0 0.0
    %889 = vmatpush1.msra.mxu0 0.0
    %890 = vmatprep.subr.mxu0 0.0
    %891 = vmatpush1.msra.mxu0 0.0
    %892 = vmatprep.subr.mxu0 0.0
    %893 = vmatpush1.msra.mxu0 0.0
    %894 = vmatprep.subr.mxu0 0.0
    %895 = vmatpush1.msra.mxu0 0.0
    %896 = vmatprep.subr.mxu0 0.0
    %897 = vmatpush1.msra.mxu0 0.0
    %898 = vmatprep.subr.mxu0 0.0
    %899 = vmatpush1.msra.mxu0 0.0
    %900 = vmatprep.subr.mxu0 0.0
    %901 = vmatpush1.msra.mxu0 0.0
    %902 = vmatprep.subr.mxu0 0.0
    %903 = vmatpush1.msra.mxu0 0.0
    %904 = vmatprep.mubr.f32.mxu0 0.0
    %905 = vmatmul.mubr.f32.gmra.mrb[0].mxu0 %v326
    %v906 = vpop.f32.mrb[0].mxu0
    %v907 = vadd.f32 %v628, %v906
    %v908 = vpop.f32.mrb[0].mxu0
    %909 = vdwg.mxu0
    %v910 = vld [vmem:[%s8] sm:$0x1]
    %v912 = vlaneseq
    %v913 = vshrl.u32 %v912, 7
    %v914 = vsub.s32 0, %v913
    %v915 = vrot.slane %v910, %v914
    %v917 = vmul.f32 %v102, %v915
    %v918 = vmul.f32 %v103, %v915
    %v919 = vmul.f32 %v104, %v915
    %v920 = vmul.f32 %v105, %v915
    %v921 = vadd.f32 %v697, %v917
    %v922 = vadd.f32 %v767, %v918
    %v923 = vadd.f32 %v837, %v919
    %v924 = vadd.f32 %v907, %v920
    %v925 = vld [vmem:[%s9] sm:$0xff]
    %v926 = vld [vmem:[%s9 + $0x8] sm:$0xff]
    %v927 = vld [vmem:[%s9 + $0x10] sm:$0xff]
    %v928 = vld [vmem:[%s9 + $0x18] sm:$0xff]
    %v929 = vld [vmem:[%s9 + $0x20] sm:$0xff]
    %v930 = vld [vmem:[%s9 + $0x28] sm:$0xff]
    %v931 = vld [vmem:[%s9 + $0x30] sm:$0xff]
    %v932 = vld [vmem:[%s9 + $0x38] sm:$0xff]
    %v933 = vld [vmem:[%s9 + $0x40] sm:$0xff]
    %v934 = vld [vmem:[%s9 + $0x48] sm:$0xff]
    %v935 = vld [vmem:[%s9 + $0x50] sm:$0xff]
    %v936 = vld [vmem:[%s9 + $0x58] sm:$0xff]
    %v937 = vld [vmem:[%s9 + $0x60] sm:$0xff]
    %v938 = vld [vmem:[%s9 + $0x68] sm:$0xff]
    %v939 = vld [vmem:[%s9 + $0x70] sm:$0xff]
    %v940 = vld [vmem:[%s9 + $0x78] sm:$0xff]
    %941 = vmatprep.subr.mxu0 0.0
    %942 = vmatpush1.msra.mxu0 %v925
    %943 = vmatprep.subr.mxu0 0.0
    %944 = vmatpush1.msra.mxu0 %v926
    %945 = vmatprep.subr.mxu0 0.0
    %946 = vmatpush1.msra.mxu0 %v927
    %947 = vmatprep.subr.mxu0 0.0
    %948 = vmatpush1.msra.mxu0 %v928
    %949 = vmatprep.subr.mxu0 0.0
    %950 = vmatpush1.msra.mxu0 %v929
    %951 = vmatprep.subr.mxu0 0.0
    %952 = vmatpush1.msra.mxu0 %v930
    %953 = vmatprep.subr.mxu0 0.0
    %954 = vmatpush1.msra.mxu0 %v931
    %955 = vmatprep.subr.mxu0 0.0
    %956 = vmatpush1.msra.mxu0 %v932
    %957 = vmatprep.subr.mxu0 0.0
    %958 = vmatpush1.msra.mxu0 %v933
    %959 = vmatprep.subr.mxu0 0.0
    %960 = vmatpush1.msra.mxu0 %v934
    %961 = vmatprep.subr.mxu0 0.0
    %962 = vmatpush1.msra.mxu0 %v935
    %963 = vmatprep.subr.mxu0 0.0
    %964 = vmatpush1.msra.mxu0 %v936
    %965 = vmatprep.subr.mxu0 0.0
    %966 = vmatpush1.msra.mxu0 %v937
    %967 = vmatprep.subr.mxu0 0.0
    %968 = vmatpush1.msra.mxu0 %v938
    %969 = vmatprep.subr.mxu0 0.0
    %970 = vmatpush1.msra.mxu0 %v939
    %971 = vmatprep.subr.mxu0 0.0
    %972 = vmatpush1.msra.mxu0 %v940
    %973 = vmatprep.subr.mxu0 0.0
    %974 = vmatpush1.msra.mxu0 0.0
    %975 = vmatprep.subr.mxu0 0.0
    %976 = vmatpush1.msra.mxu0 0.0
    %977 = vmatprep.subr.mxu0 0.0
    %978 = vmatpush1.msra.mxu0 0.0
    %979 = vmatprep.subr.mxu0 0.0
    %980 = vmatpush1.msra.mxu0 0.0
    %981 = vmatprep.subr.mxu0 0.0
    %982 = vmatpush1.msra.mxu0 0.0
    %983 = vmatprep.subr.mxu0 0.0
    %984 = vmatpush1.msra.mxu0 0.0
    %985 = vmatprep.subr.mxu0 0.0
    %986 = vmatpush1.msra.mxu0 0.0
    %987 = vmatprep.subr.mxu0 0.0
    %988 = vmatpush1.msra.mxu0 0.0
    %989 = vmatprep.subr.mxu0 0.0
    %990 = vmatpush1.msra.mxu0 0.0
    %991 = vmatprep.subr.mxu0 0.0
    %992 = vmatpush1.msra.mxu0 0.0
    %993 = vmatprep.subr.mxu0 0.0
    %994 = vmatpush1.msra.mxu0 0.0
    %995 = vmatprep.subr.mxu0 0.0
    %996 = vmatpush1.msra.mxu0 0.0
    %997 = vmatprep.subr.mxu0 0.0
    %998 = vmatpush1.msra.mxu0 0.0
    %999 = vmatprep.subr.mxu0 0.0
    %1000 = vmatpush1.msra.mxu0 0.0
    %1001 = vmatprep.subr.mxu0 0.0
    %1002 = vmatpush1.msra.mxu0 0.0
    %1003 = vmatprep.subr.mxu0 0.0
    %1004 = vmatpush1.msra.mxu0 0.0
    %1005 = vmatprep.mubr.f32.mxu0 0.0
    %1006 = vmatmul.mubr.f32.gmra.mrb[0].mxu0 %v921
    %v1007 = vpop.f32.mrb[0].mxu0
    %v1008 = vadd.f32 0.0, %v1007
    %v1009 = vpop.f32.mrb[0].mxu0
    %1010 = vmatprep.mubr.f32.mxu0 0.0
    %1011 = vmatmul.mubr.f32.gmra.mrb[0].mxu0 %v922
    %v1012 = vpop.f32.mrb[0].mxu0
    %v1013 = vadd.f32 0.0, %v1012
    %v1014 = vpop.f32.mrb[0].mxu0
    %1015 = vmatprep.mubr.f32.mxu0 0.0
    %1016 = vmatmul.mubr.f32.gmra.mrb[0].mxu0 %v923
    %v1017 = vpop.f32.mrb[0].mxu0
    %v1018 = vadd.f32 0.0, %v1017
    %v1019 = vpop.f32.mrb[0].mxu0
    %1020 = vmatprep.mubr.f32.mxu0 0.0
    %1021 = vmatmul.mubr.f32.gmra.mrb[0].mxu0 %v924
    %v1022 = vpop.f32.mrb[0].mxu0
    %v1023 = vadd.f32 0.0, %v1022
    %v1024 = vpop.f32.mrb[0].mxu0
    %1025 = vdwg.mxu0
    %v1026 = vld [vmem:[%s10] sm:$0x1]
    %v1028 = vlaneseq
    %v1029 = vshrl.u32 %v1028, 7
    %v1030 = vsub.s32 0, %v1029
    %v1031 = vrot.slane %v1026, %v1030
    %1033 = vmatprep.subr.mxu0 0.0
    %1034 = vmatpush1.msra.mxu0 %v1008
    %1035 = vmatprep.subr.mxu0 0.0
    %1036 = vmatpush1.msra.mxu0 0.0
    %1037 = vmatprep.subr.mxu0 0.0
    %1038 = vmatpush1.msra.mxu0 0.0
    %1039 = vmatprep.subr.mxu0 0.0
    %1040 = vmatpush1.msra.mxu0 0.0
    %1041 = vmatprep.subr.mxu0 0.0
    %1042 = vmatpush1.msra.mxu0 0.0
    %1043 = vmatprep.subr.mxu0 0.0
    %1044 = vmatpush1.msra.mxu0 0.0
    %1045 = vmatprep.subr.mxu0 0.0
    %1046 = vmatpush1.msra.mxu0 0.0
    %1047 = vmatprep.subr.mxu0 0.0
    %1048 = vmatpush1.msra.mxu0 0.0
    %1049 = vmatprep.subr.mxu0 0.0
    %1050 = vmatpush1.msra.mxu0 0.0
    %1051 = vmatprep.subr.mxu0 0.0
    %1052 = vmatpush1.msra.mxu0 0.0
    %1053 = vmatprep.subr.mxu0 0.0
    %1054 = vmatpush1.msra.mxu0 0.0
    %1055 = vmatprep.subr.mxu0 0.0
    %1056 = vmatpush1.msra.mxu0 0.0
    %1057 = vmatprep.subr.mxu0 0.0
    %1058 = vmatpush1.msra.mxu0 0.0
    %1059 = vmatprep.subr.mxu0 0.0
    %1060 = vmatpush1.msra.mxu0 0.0
    %1061 = vmatprep.subr.mxu0 0.0
    %1062 = vmatpush1.msra.mxu0 0.0
    %1063 = vmatprep.subr.mxu0 0.0
    %1064 = vmatpush1.msra.mxu0 0.0
    %1065 = vmatprep.subr.mxu0 0.0
    %1066 = vmatpush1.msra.mxu0 0.0
    %1067 = vmatprep.subr.mxu0 0.0
    %1068 = vmatpush1.msra.mxu0 0.0
    %1069 = vmatprep.subr.mxu0 0.0
    %1070 = vmatpush1.msra.mxu0 0.0
    %1071 = vmatprep.subr.mxu0 0.0
    %1072 = vmatpush1.msra.mxu0 0.0
    %1073 = vmatprep.subr.mxu0 0.0
    %1074 = vmatpush1.msra.mxu0 0.0
    %1075 = vmatprep.subr.mxu0 0.0
    %1076 = vmatpush1.msra.mxu0 0.0
    %1077 = vmatprep.subr.mxu0 0.0
    %1078 = vmatpush1.msra.mxu0 0.0
    %1079 = vmatprep.subr.mxu0 0.0
    %1080 = vmatpush1.msra.mxu0 0.0
    %1081 = vmatprep.subr.mxu0 0.0
    %1082 = vmatpush1.msra.mxu0 0.0
    %1083 = vmatprep.subr.mxu0 0.0
    %1084 = vmatpush1.msra.mxu0 0.0
    %1085 = vmatprep.subr.mxu0 0.0
    %1086 = vmatpush1.msra.mxu0 0.0
    %1087 = vmatprep.subr.mxu0 0.0
    %1088 = vmatpush1.msra.mxu0 0.0
    %1089 = vmatprep.subr.mxu0 0.0
    %1090 = vmatpush1.msra.mxu0 0.0
    %1091 = vmatprep.subr.mxu0 0.0
    %1092 = vmatpush1.msra.mxu0 0.0
    %1093 = vmatprep.subr.mxu0 0.0
    %1094 = vmatpush1.msra.mxu0 0.0
    %1095 = vmatprep.subr.mxu0 0.0
    %1096 = vmatpush1.msra.mxu0 0.0
    %1097 = vmatprep.mubr.f32.mxu0 0.0
    %1098 = vmatmul.mubr.f32.gmra.mrb[0].mxu0 %v107
    %v1099 = vpop.f32.mrb[0].mxu0
    %v1100 = vadd.f32 %v1031, %v1099
    %v1101 = vpop.f32.mrb[0].mxu0
    %1102 = vdwg.mxu0
    %1103 = vmatprep.subr.mxu0 0.0
    %1104 = vmatpush1.msra.mxu0 %v1013
    %1105 = vmatprep.subr.mxu0 0.0
    %1106 = vmatpush1.msra.mxu0 0.0
    %1107 = vmatprep.subr.mxu0 0.0
    %1108 = vmatpush1.msra.mxu0 0.0
    %1109 = vmatprep.subr.mxu0 0.0
    %1110 = vmatpush1.msra.mxu0 0.0
    %1111 = vmatprep.subr.mxu0 0.0
    %1112 = vmatpush1.msra.mxu0 0.0
    %1113 = vmatprep.subr.mxu0 0.0
    %1114 = vmatpush1.msra.mxu0 0.0
    %1115 = vmatprep.subr.mxu0 0.0
    %1116 = vmatpush1.msra.mxu0 0.0
    %1117 = vmatprep.subr.mxu0 0.0
    %1118 = vmatpush1.msra.mxu0 0.0
    %1119 = vmatprep.subr.mxu0 0.0
    %1120 = vmatpush1.msra.mxu0 0.0
    %1121 = vmatprep.subr.mxu0 0.0
    %1122 = vmatpush1.msra.mxu0 0.0
    %1123 = vmatprep.subr.mxu0 0.0
    %1124 = vmatpush1.msra.mxu0 0.0
    %1125 = vmatprep.subr.mxu0 0.0
    %1126 = vmatpush1.msra.mxu0 0.0
    %1127 = vmatprep.subr.mxu0 0.0
    %1128 = vmatpush1.msra.mxu0 0.0
    %1129 = vmatprep.subr.mxu0 0.0
    %1130 = vmatpush1.msra.mxu0 0.0
    %1131 = vmatprep.subr.mxu0 0.0
    %1132 = vmatpush1.msra.mxu0 0.0
    %1133 = vmatprep.subr.mxu0 0.0
    %1134 = vmatpush1.msra.mxu0 0.0
    %1135 = vmatprep.subr.mxu0 0.0
    %1136 = vmatpush1.msra.mxu0 0.0
    %1137 = vmatprep.subr.mxu0 0.0
    %1138 = vmatpush1.msra.mxu0 0.0
    %1139 = vmatprep.subr.mxu0 0.0
    %1140 = vmatpush1.msra.mxu0 0.0
    %1141 = vmatprep.subr.mxu0 0.0
    %1142 = vmatpush1.msra.mxu0 0.0
    %1143 = vmatprep.subr.mxu0 0.0
    %1144 = vmatpush1.msra.mxu0 0.0
    %1145 = vmatprep.subr.mxu0 0.0
    %1146 = vmatpush1.msra.mxu0 0.0
    %1147 = vmatprep.subr.mxu0 0.0
    %1148 = vmatpush1.msra.mxu0 0.0
    %1149 = vmatprep.subr.mxu0 0.0
    %1150 = vmatpush1.msra.mxu0 0.0
    %1151 = vmatprep.subr.mxu0 0.0
    %1152 = vmatpush1.msra.mxu0 0.0
    %1153 = vmatprep.subr.mxu0 0.0
    %1154 = vmatpush1.msra.mxu0 0.0
    %1155 = vmatprep.subr.mxu0 0.0
    %1156 = vmatpush1.msra.mxu0 0.0
    %1157 = vmatprep.subr.mxu0 0.0
    %1158 = vmatpush1.msra.mxu0 0.0
    %1159 = vmatprep.subr.mxu0 0.0
    %1160 = vmatpush1.msra.mxu0 0.0
    %1161 = vmatprep.subr.mxu0 0.0
    %1162 = vmatpush1.msra.mxu0 0.0
    %1163 = vmatprep.subr.mxu0 0.0
    %1164 = vmatpush1.msra.mxu0 0.0
    %1165 = vmatprep.subr.mxu0 0.0
    %1166 = vmatpush1.msra.mxu0 0.0
    %1167 = vmatprep.mubr.f32.mxu0 0.0
    %1168 = vmatmul.mubr.f32.gmra.mrb[0].mxu0 %v180
    %v1169 = vpop.f32.mrb[0].mxu0
    %v1170 = vadd.f32 %v1031, %v1169
    %v1171 = vpop.f32.mrb[0].mxu0
    %1172 = vdwg.mxu0
    %1173 = vmatprep.subr.mxu0 0.0
    %1174 = vmatpush1.msra.mxu0 %v1018
    %1175 = vmatprep.subr.mxu0 0.0
    %1176 = vmatpush1.msra.mxu0 0.0
    %1177 = vmatprep.subr.mxu0 0.0
    %1178 = vmatpush1.msra.mxu0 0.0
    %1179 = vmatprep.subr.mxu0 0.0
    %1180 = vmatpush1.msra.mxu0 0.0
    %1181 = vmatprep.subr.mxu0 0.0
    %1182 = vmatpush1.msra.mxu0 0.0
    %1183 = vmatprep.subr.mxu0 0.0
    %1184 = vmatpush1.msra.mxu0 0.0
    %1185 = vmatprep.subr.mxu0 0.0
    %1186 = vmatpush1.msra.mxu0 0.0
    %1187 = vmatprep.subr.mxu0 0.0
    %1188 = vmatpush1.msra.mxu0 0.0
    %1189 = vmatprep.subr.mxu0 0.0
    %1190 = vmatpush1.msra.mxu0 0.0
    %1191 = vmatprep.subr.mxu0 0.0
    %1192 = vmatpush1.msra.mxu0 0.0
    %1193 = vmatprep.subr.mxu0 0.0
    %1194 = vmatpush1.msra.mxu0 0.0
    %1195 = vmatprep.subr.mxu0 0.0
    %1196 = vmatpush1.msra.mxu0 0.0
    %1197 = vmatprep.subr.mxu0 0.0
    %1198 = vmatpush1.msra.mxu0 0.0
    %1199 = vmatprep.subr.mxu0 0.0
    %1200 = vmatpush1.msra.mxu0 0.0
    %1201 = vmatprep.subr.mxu0 0.0
    %1202 = vmatpush1.msra.mxu0 0.0
    %1203 = vmatprep.subr.mxu0 0.0
    %1204 = vmatpush1.msra.mxu0 0.0
    %1205 = vmatprep.subr.mxu0 0.0
    %1206 = vmatpush1.msra.mxu0 0.0
    %1207 = vmatprep.subr.mxu0 0.0
    %1208 = vmatpush1.msra.mxu0 0.0
    %1209 = vmatprep.subr.mxu0 0.0
    %1210 = vmatpush1.msra.mxu0 0.0
    %1211 = vmatprep.subr.mxu0 0.0
    %1212 = vmatpush1.msra.mxu0 0.0
    %1213 = vmatprep.subr.mxu0 0.0
    %1214 = vmatpush1.msra.mxu0 0.0
    %1215 = vmatprep.subr.mxu0 0.0
    %1216 = vmatpush1.msra.mxu0 0.0
    %1217 = vmatprep.subr.mxu0 0.0
    %1218 = vmatpush1.msra.mxu0 0.0
    %1219 = vmatprep.subr.mxu0 0.0
    %1220 = vmatpush1.msra.mxu0 0.0
    %1221 = vmatprep.subr.mxu0 0.0
    %1222 = vmatpush1.msra.mxu0 0.0
    %1223 = vmatprep.subr.mxu0 0.0
    %1224 = vmatpush1.msra.mxu0 0.0
    %1225 = vmatprep.subr.mxu0 0.0
    %1226 = vmatpush1.msra.mxu0 0.0
    %1227 = vmatprep.subr.mxu0 0.0
    %1228 = vmatpush1.msra.mxu0 0.0
    %1229 = vmatprep.subr.mxu0 0.0
    %1230 = vmatpush1.msra.mxu0 0.0
    %1231 = vmatprep.subr.mxu0 0.0
    %1232 = vmatpush1.msra.mxu0 0.0
    %1233 = vmatprep.subr.mxu0 0.0
    %1234 = vmatpush1.msra.mxu0 0.0
    %1235 = vmatprep.subr.mxu0 0.0
    %1236 = vmatpush1.msra.mxu0 0.0
    %1237 = vmatprep.mubr.f32.mxu0 0.0
    %1238 = vmatmul.mubr.f32.gmra.mrb[0].mxu0 %v253
    %v1239 = vpop.f32.mrb[0].mxu0
    %v1240 = vadd.f32 %v1031, %v1239
    %v1241 = vpop.f32.mrb[0].mxu0
    %1242 = vdwg.mxu0
    %1243 = vmatprep.subr.mxu0 0.0
    %1244 = vmatpush1.msra.mxu0 %v1023
    %1245 = vmatprep.subr.mxu0 0.0
    %1246 = vmatpush1.msra.mxu0 0.0
    %1247 = vmatprep.subr.mxu0 0.0
    %1248 = vmatpush1.msra.mxu0 0.0
    %1249 = vmatprep.subr.mxu0 0.0
    %1250 = vmatpush1.msra.mxu0 0.0
    %1251 = vmatprep.subr.mxu0 0.0
    %1252 = vmatpush1.msra.mxu0 0.0
    %1253 = vmatprep.subr.mxu0 0.0
    %1254 = vmatpush1.msra.mxu0 0.0
    %1255 = vmatprep.subr.mxu0 0.0
    %1256 = vmatpush1.msra.mxu0 0.0
    %1257 = vmatprep.subr.mxu0 0.0
    %1258 = vmatpush1.msra.mxu0 0.0
    %1259 = vmatprep.subr.mxu0 0.0
    %1260 = vmatpush1.msra.mxu0 0.0
    %1261 = vmatprep.subr.mxu0 0.0
    %1262 = vmatpush1.msra.mxu0 0.0
    %1263 = vmatprep.subr.mxu0 0.0
    %1264 = vmatpush1.msra.mxu0 0.0
    %1265 = vmatprep.subr.mxu0 0.0
    %1266 = vmatpush1.msra.mxu0 0.0
    %1267 = vmatprep.subr.mxu0 0.0
    %1268 = vmatpush1.msra.mxu0 0.0
    %1269 = vmatprep.subr.mxu0 0.0
    %1270 = vmatpush1.msra.mxu0 0.0
    %1271 = vmatprep.subr.mxu0 0.0
    %1272 = vmatpush1.msra.mxu0 0.0
    %1273 = vmatprep.subr.mxu0 0.0
    %1274 = vmatpush1.msra.mxu0 0.0
    %1275 = vmatprep.subr.mxu0 0.0
    %1276 = vmatpush1.msra.mxu0 0.0
    %1277 = vmatprep.subr.mxu0 0.0
    %1278 = vmatpush1.msra.mxu0 0.0
    %1279 = vmatprep.subr.mxu0 0.0
    %1280 = vmatpush1.msra.mxu0 0.0
    %1281 = vmatprep.subr.mxu0 0.0
    %1282 = vmatpush1.msra.mxu0 0.0
    %1283 = vmatprep.subr.mxu0 0.0
    %1284 = vmatpush1.msra.mxu0 0.0
    %1285 = vmatprep.subr.mxu0 0.0
    %1286 = vmatpush1.msra.mxu0 0.0
    %1287 = vmatprep.subr.mxu0 0.0
    %1288 = vmatpush1.msra.mxu0 0.0
    %1289 = vmatprep.subr.mxu0 0.0
    %1290 = vmatpush1.msra.mxu0 0.0
    %1291 = vmatprep.subr.mxu0 0.0
    %1292 = vmatpush1.msra.mxu0 0.0
    %1293 = vmatprep.subr.mxu0 0.0
    %1294 = vmatpush1.msra.mxu0 0.0
    %1295 = vmatprep.subr.mxu0 0.0
    %1296 = vmatpush1.msra.mxu0 0.0
    %1297 = vmatprep.subr.mxu0 0.0
    %1298 = vmatpush1.msra.mxu0 0.0
    %1299 = vmatprep.subr.mxu0 0.0
    %1300 = vmatpush1.msra.mxu0 0.0
    %1301 = vmatprep.subr.mxu0 0.0
    %1302 = vmatpush1.msra.mxu0 0.0
    %1303 = vmatprep.subr.mxu0 0.0
    %1304 = vmatpush1.msra.mxu0 0.0
    %1305 = vmatprep.subr.mxu0 0.0
    %1306 = vmatpush1.msra.mxu0 0.0
    %1307 = vmatprep.mubr.f32.mxu0 0.0
    %1308 = vmatmul.mubr.f32.gmra.mrb[0].mxu0 %v326
    %v1309 = vpop.f32.mrb[0].mxu0
    %v1310 = vadd.f32 %v1031, %v1309
    %v1311 = vpop.f32.mrb[0].mxu0
    %1312 = vdwg.mxu0
    %v1313 = vld [vmem:[%s11] sm:$0x1]
    %v1315 = vlaneseq
    %v1316 = vshrl.u32 %v1315, 7
    %v1317 = vsub.s32 0, %v1316
    %v1318 = vrot.slane %v1313, %v1317
    %v1320 = vmul.f32 %v102, %v1318
    %v1321 = vmul.f32 %v103, %v1318
    %v1322 = vmul.f32 %v104, %v1318
    %v1323 = vmul.f32 %v105, %v1318
    %v1324 = vadd.f32 %v1100, %v1320
    %v1325 = vadd.f32 %v1170, %v1321
    %v1326 = vadd.f32 %v1240, %v1322
    %v1327 = vadd.f32 %v1310, %v1323
    %1328 = vst [vmem:[#allocation2] sm:$0xff] %v1324
    %1329 = vst [vmem:[#allocation2 + $0x8] sm:$0xff] %v1325
    %1330 = vst [vmem:[#allocation2 + $0x10] sm:$0xff] %v1326
    %1331 = vst [vmem:[#allocation2 + $0x18] sm:$0xff] %v1327
    // Predicated region
    $region50: #{gcn_rl_edge_forward.1} parent=1 // pred_check
      _
    $region51: #{gcn_rl_edge_forward.1} parent=1 // pred_check_branch
      %1333 = sbr.rel (0) target = $region53
    $region52: #{gcn_rl_edge_forward.1} parent=1 // pred_region
      %s1335 = ssub.s32 512, 512
      %1336 = vsyncadd [#allocation3], %s1335
      %s1337 = sshll.u32 [#allocation2], 4
      %s1338 = int_to_ptr.vmem [resolvable:$true] %s1337
      %1343 = dma.vmem_to_hbm [thread:$0]  %s1338, 512, %s12, [#allocation3], 128, 128, 8
    $region53: #{gcn_rl_edge_forward.1} parent=1 // pred_fallthru
      _
    // Predicated region
    $region54: #{gcn_rl_edge_forward.1} parent=1 // pred_check
      _
    $region55: #{gcn_rl_edge_forward.1} parent=1 // pred_check_branch
      %1345 = sbr.rel (0) target = $region57
    $region56: #{gcn_rl_edge_forward.1} parent=1 // pred_region
      %1346 = dma.done [#allocation3], 512
    $region57: #{gcn_rl_edge_forward.1} parent=1 // pred_fallthru
      _
    %1347 = vsyncpa [#allocation3], 1

</llo_original>
